<compile_context>
chip_gen: v7x
topology: tpu7x:2x2x1
jax: 0.10.0
libtpu: 0.0.40
codegen_flags: <defaults>
</compile_context>

<pallas_src>
import functools
import math

import jax
import jax.numpy as jnp
import numpy as np
from jax import lax
from jax.experimental import pallas as pl
from jax.experimental.pallas import tpu as pltpu


def _nonlocal_kernel(xf_ref, wq_ref, bq_ref, wkv_ref, bkv_ref,
                     wo_ref, bo_ref, o_ref, q_scr, kv_scr, ho_scr,
                     *, num_heads, hidden, residual, l_valid, unroll_heads):
    """One (batch, query-tile) grid step, channels-first layout."""
    HH = num_heads * hidden
    cdtype = kv_scr.dtype                    # MXU operand dtype (= input dtype)
    TQ = o_ref.shape[2]
    Lp = kv_scr.shape[1]
    j = pl.program_id(1)

    # ---- fused K/V projection: computed once per batch row (j == 0) and kept
    # ---- resident in VMEM scratch for all query tiles of this row.
    @pl.when(j == 0)
    def _():
        xf = xf_ref[0]                                           # (C, Lp)
        kv = jnp.dot(wkv_ref[...], xf, preferred_element_type=jnp.float32)
        kv_scr[...] = (kv + bkv_ref[...]).astype(cdtype)         # (2*HH, Lp)

    # ---- Q projection for this query tile (1/sqrt(d) folded into wq / bq).
    q0 = pl.multiple_of(j * TQ, TQ)
    xq = xf_ref[0, :, pl.ds(q0, TQ)]                             # (C, TQ)
    q = jnp.dot(wq_ref[...], xq, preferred_element_type=jnp.float32)
    q_scr[...] = (q + bq_ref[...]).astype(cdtype)                # (HH, TQ)

    # key-padding mask bias (only when L was padded up to a lane multiple)
    if l_valid < Lp:
        kidx = lax.broadcasted_iota(jnp.int32, (Lp, 1), 0)
        mask_bias = jnp.where(kidx < l_valid, 0.0, -1e30).astype(jnp.float32)
    else:
        mask_bias = None

    # NOTE: per-head slices stay sublane-aligned as long as `hidden` is a
    # multiple of 8 (f32) / 16 (bf16); other values are correct but slower.
    def head_body(h, carry):
        lo = pl.multiple_of(h * hidden, hidden)
        vlo = pl.multiple_of(HH + h * hidden, hidden)
        qh = q_scr[pl.ds(lo, hidden), :]                         # (d, TQ)
        kh = kv_scr[pl.ds(lo, hidden), :]                        # (d, Lp)
        vh = kv_scr[pl.ds(vlo, hidden), :]                       # (d, Lp)

        # scores with keys on sublanes, queries on lanes: (Lp, TQ)
        s = lax.dot_general(kh, qh, (((0,), (0,)), ((), ())),
                            preferred_element_type=jnp.float32)
        if mask_bias is not None:
            s = s + mask_bias
        m = jnp.max(s, axis=0, keepdims=True)                    # (1, TQ)
        p = jnp.exp(s - m)                                       # (Lp, TQ)
        denom = jnp.sum(p, axis=0, keepdims=True)                # (1, TQ)

        # un-normalized PV matmul, then exact normalization on the small
        # (d, TQ) result (flash-style: no (Lp, TQ) normalization pass).
        ho = lax.dot_general(vh, p.astype(cdtype), (((1,), (0,)), ((), ())),
                             preferred_element_type=jnp.float32)  # (d, TQ)
        ho_scr[pl.ds(lo, hidden), :] = (ho * (1.0 / denom)).astype(cdtype)
        return carry

    lax.fori_loop(0, num_heads, head_body, 0, unroll=unroll_heads)

    # ---- single output projection with full-depth (HH) contraction.
    y = lax.dot_general(wo_ref[...], ho_scr[...], (((0,), (0,)), ((), ())),
                        preferred_element_type=jnp.float32)       # (C, TQ)
    y = y + bo_ref[...]
    if residual:
        y = y + xq.astype(jnp.float32)
    o_ref[0] = y.astype(o_ref.dtype)


def _vmem_estimate(Lp, tq, C, HH, itemsize):
    """Rough VMEM footprint model for one grid step (bytes)."""
    return (2 * C * Lp * itemsize            # full-row x input (double-buffered)
            + 2 * C * tq * itemsize          # output tile (double-buffered)
            + 2 * HH * Lp * itemsize         # K/V scratch
            + 2 * HH * tq * itemsize         # Q + per-head output scratch
            + 6 * HH * C * itemsize + 4 * C  # weights / biases
            + 3 * Lp * tq * 4)               # f32 score / prob temporaries


def _pick_tile(Lp, C, HH, itemsize, budget_bytes=48 * 2**20):
    """Largest query tile (multiple of 128) dividing Lp that fits the budget
    (48 MiB keeps headroom on v7x's 64 MiB VMEM)."""
    for t in (512, 256, 128):
        if Lp % t == 0 and _vmem_estimate(Lp, t, C, HH, itemsize) <= budget_bytes:
            return t
    # TODO(synk): for very large L (>~8K) tile the key axis with an online
    # softmax instead of materializing the full (Lp, TQ) score matrix.
    return 128


def multihead_nonlocal_2d(x_nchw, params, *, num_heads, hidden,
                          residual=True, scaled=True):
    """Forward pass of _MultiheadNonlocalNd (2-D, default 1x1-conv config)."""
    N, C, H, W = x_nchw.shape
    L = H * W
    HH = num_heads * hidden
    dtype = x_nchw.dtype
    itemsize = jnp.dtype(dtype).itemsize

    # NCHW -> (N, C, L): free reshape; spatial axis lands in the lane dim.
    x = x_nchw.reshape(N, C, L)
    Lp = ((L + 127) // 128) * 128            # lane-dense stores / tiles
    if Lp != L:
        x = jnp.pad(x, ((0, 0), (0, 0), (0, Lp - L)))

    ew = params["embed_w"].astype(jnp.float32)   # (3*HH, C)  1x1 Conv2d weight
    eb = params["embed_b"].astype(jnp.float32)   # (3*HH,)
    ow = params["out_w"]                         # (HH, C)    1x1 ConvTranspose2d
    ob = params["out_b"]                         # (C,)

    scale = (1.0 / math.sqrt(hidden)) if scaled else 1.0
    wq = (ew[0:HH] * scale).astype(dtype)        # scale folded into Q proj
    bq = (eb[0:HH] * scale).reshape(HH, 1)
    wkv = ew[HH:3 * HH].astype(dtype)            # fused K+V projection
    bkv = eb[HH:3 * HH].reshape(2 * HH, 1)
    wo = ow.astype(dtype)
    bo = ob.astype(jnp.float32).reshape(C, 1)

    TQ = _pick_tile(Lp, C, HH, itemsize)
    grid = (N, Lp // TQ)
    vmem_limit = int(min(64 * 2**20,
                         max(32 * 2**20,
                             2 * _vmem_estimate(Lp, TQ, C, HH, itemsize))))

    def full_spec(arr):
        nd = arr.ndim
        return pl.BlockSpec(arr.shape, lambda n, j, nd=nd: (0,) * nd)

    kernel = functools.partial(_nonlocal_kernel, num_heads=num_heads,
                               hidden=hidden, residual=residual,
                               l_valid=L, unroll_heads=num_heads <= 4)

    out = pl.pallas_call(
        kernel,
        out_shape=jax.ShapeDtypeStruct((N, C, Lp), dtype),
        grid=grid,
        in_specs=[
            pl.BlockSpec((1, C, Lp), lambda n, j: (n, 0, 0)),    # x (full row)
            full_spec(wq), full_spec(bq),
            full_spec(wkv), full_spec(bkv),
            full_spec(wo), full_spec(bo),
        ],
        out_specs=pl.BlockSpec((1, C, TQ), lambda n, j: (n, 0, j)),
        scratch_shapes=[
            pltpu.VMEM((HH, TQ), dtype),        # Q for this tile
            pltpu.VMEM((2 * HH, Lp), dtype),    # K & V (computed once per row)
            pltpu.VMEM((HH, TQ), dtype),        # per-head attention outputs
        ],
        # j axis must be "arbitrary": kv_scr is initialized at j == 0 and
        # reused by all later j steps of the same batch row.
        compiler_params=pltpu.CompilerParams(
            dimension_semantics=("parallel", "arbitrary"),
            vmem_limit_bytes=vmem_limit),
    )(x, wq, bq, wkv, bkv, wo, bo)

    if Lp != L:
        out = out[:, :, :L]
    return out.reshape(N, C, H, W)


def reference(x_nchw, params, *, num_heads, hidden, scaled=True, residual=True):
    """Pure-JAX reference matching the PyTorch forward semantics."""
    N, C, H, W = x_nchw.shape
    L = H * W
    HH = num_heads * hidden
    ew, eb, ow, ob = (params["embed_w"], params["embed_b"],
                      params["out_w"], params["out_b"])
    x_flat = x_nchw.reshape(N, C, L)
    embed = jnp.einsum("oc,ncl->nol", ew, x_flat) + eb[None, :, None]  # (N,3HH,L)
    q, k, v = jnp.split(embed, 3, axis=1)
    q = q.reshape(N, num_heads, hidden, L)
    k = k.reshape(N, num_heads, hidden, L)
    v = v.reshape(N, num_heads, hidden, L)
    s = jnp.einsum("nhdi,nhdj->nhij", q, k)
    if scaled:
        s = s / math.sqrt(hidden)
    a = jax.nn.softmax(s, axis=-1)
    o = jnp.einsum("nhij,nhdj->nhdi", a, v).reshape(N, HH, L)
    out = jnp.einsum("ic,nil->ncl", ow, o) + ob[None, :, None]
    out = out.reshape(N, C, H, W)
    if residual:
        out = out + x_nchw
    return out


if __name__ == "__main__":
    # Small shapes consistent with the module's forward.
    N, C, H, W = 2, 4, 16, 16
    num_heads, hidden = 2, 8
    HH = num_heads * hidden

    key = jax.random.PRNGKey(0)
    kx, kw1, kw2 = jax.random.split(key, 3)

    x = jax.random.normal(kx, (N, C, H, W), dtype=jnp.float32)

    # Deterministic kaiming_normal(mode='fan_out') init, biases zero.
    embed_w = jax.random.normal(kw1, (3 * HH, C), jnp.float32) * math.sqrt(2.0 / (3 * HH))
    embed_b = jnp.zeros((3 * HH,), jnp.float32)
    out_w = jax.random.normal(kw2, (HH, C), jnp.float32) * math.sqrt(2.0 / HH)
    out_b = jnp.zeros((C,), jnp.float32)

    params = dict(embed_w=embed_w, embed_b=embed_b, out_w=out_w, out_b=out_b)

    y = multihead_nonlocal_2d(x, params, num_heads=num_heads, hidden=hidden)
    y = jax.block_until_ready(y)

    y_ref = reference(x, params, num_heads=num_heads, hidden=hidden)
    np.testing.assert_allclose(np.asarray(y), np.asarray(y_ref),
                               rtol=2e-3, atol=2e-3)

    # TODO(synk): kernel_size>1 / strided conv + conv-transpose paths and
    # nystrom/none attention variants are not implemented (default config only).
    print("KERNEL_OK")
</pallas_src>

<mosaic_0001>
module attributes {stable_mosaic.version = 11 : i64} {
  func.func @_nonlocal_kernel(%arg0: i32, %arg1: i32, %arg2: memref<1x4x256xf32, #tpu.memory_space<vmem>>, %arg3: memref<16x4xf32, #tpu.memory_space<vmem>>, %arg4: memref<16x1xf32, #tpu.memory_space<vmem>>, %arg5: memref<32x4xf32, #tpu.memory_space<vmem>>, %arg6: memref<32x1xf32, #tpu.memory_space<vmem>>, %arg7: memref<16x4xf32, #tpu.memory_space<vmem>>, %arg8: memref<4x1xf32, #tpu.memory_space<vmem>>, %arg9: memref<1x4x256xf32, #tpu.memory_space<vmem>>, %arg10: memref<16x256xf32, #tpu.memory_space<vmem>>, %arg11: memref<32x256xf32, #tpu.memory_space<vmem>>, %arg12: memref<16x256xf32, #tpu.memory_space<vmem>>) attributes {dimension_semantics = [#tpu.dimension_semantics<parallel>, #tpu.dimension_semantics<arbitrary>], iteration_bounds = array<i64: 2, 1>, scalar_prefetch = 0 : i64, scratch_operands = 3 : i64, tpu.core_type = #tpu.core_type<tc>, window_params = [{transform_indices = @transform_0, window_bounds = array<i64: 1, 4, 256>}, {pipeline_mode = #tpu.pipeline_mode<synchronous>, transform_indices = @transform_1, window_bounds = array<i64: 16, 4>}, {pipeline_mode = #tpu.pipeline_mode<synchronous>, transform_indices = @transform_2, window_bounds = array<i64: 16, 1>}, {pipeline_mode = #tpu.pipeline_mode<synchronous>, transform_indices = @transform_3, window_bounds = array<i64: 32, 4>}, {pipeline_mode = #tpu.pipeline_mode<synchronous>, transform_indices = @transform_4, window_bounds = array<i64: 32, 1>}, {pipeline_mode = #tpu.pipeline_mode<synchronous>, transform_indices = @transform_5, window_bounds = array<i64: 16, 4>}, {pipeline_mode = #tpu.pipeline_mode<synchronous>, transform_indices = @transform_6, window_bounds = array<i64: 4, 1>}, {transform_indices = @transform_7, window_bounds = array<i64: 1, 4, 256>}]} {
    %c0_i32 = arith.constant 0 : i32
    %0 = arith.cmpi eq, %arg1, %c0_i32 : i32
    %1 = arith.extui %0 : i1 to i32
    %c0_i32_0 = arith.constant 0 : i32
    %2 = arith.cmpi ne, %1, %c0_i32_0 : i32
    scf.if %2 {
      %c0_41 = arith.constant 0 : index
      %c0_42 = arith.constant 0 : index
      %c0_43 = arith.constant 0 : index
      %76 = vector.load %arg2[%c0_41, %c0_42, %c0_43] : memref<1x4x256xf32, #tpu.memory_space<vmem>>, vector<1x4x256xf32>
      %77 = vector.shape_cast %76 : vector<1x4x256xf32> to vector<4x256xf32>
      %c0_44 = arith.constant 0 : index
      %c0_45 = arith.constant 0 : index
      %78 = vector.load %arg5[%c0_44, %c0_45] : memref<32x4xf32, #tpu.memory_space<vmem>>, vector<32x4xf32>
      %cst_46 = arith.constant dense<0.000000e+00> : vector<32x256xf32>
      %79 = tpu.matmul %78, %77, %cst_46 {dimension_numbers = #tpu.dot_dimension_numbers<[1], [0], [0], [1], [0, 0, 1, 1], [], []>} : vector<32x4xf32>, vector<4x256xf32>, vector<32x256xf32> -> vector<32x256xf32>
      %c0_47 = arith.constant 0 : index
      %c0_48 = arith.constant 0 : index
      %80 = vector.load %arg6[%c0_47, %c0_48] : memref<32x1xf32, #tpu.memory_space<vmem>>, vector<32x1xf32>
      %81 = vector.broadcast %80 : vector<32x1xf32> to vector<32x256xf32>
      %82 = arith.addf %79, %81 : vector<32x256xf32>
      %c0_49 = arith.constant 0 : index
      %c0_50 = arith.constant 0 : index
      %83 = vector.load %arg11[%c0_49, %c0_50] : memref<32x256xf32, #tpu.memory_space<vmem>>, vector<32x256xf32>
      tpu.vector_store %arg11[%c0_49, %c0_50], %82 {strides = array<i32>} : memref<32x256xf32, #tpu.memory_space<vmem>>, vector<32x256xf32>,
    } else {
    }
    %c256_i32 = arith.constant 256 : i32
    %3 = arith.muli %arg1, %c256_i32 : i32
    %4 = tpu.assume_multiple %3, 256 : i32
    %c0 = arith.constant 0 : index
    %c0_1 = arith.constant 0 : index
    %5 = arith.index_cast %4 : i32 to index
    %6 = vector.load %arg2[%c0, %c0_1, %5] : memref<1x4x256xf32, #tpu.memory_space<vmem>>, vector<1x4x256xf32>
    %7 = vector.shape_cast %6 : vector<1x4x256xf32> to vector<4x256xf32>
    %c0_2 = arith.constant 0 : index
    %c0_3 = arith.constant 0 : index
    %8 = vector.load %arg3[%c0_2, %c0_3] : memref<16x4xf32, #tpu.memory_space<vmem>>, vector<16x4xf32>
    %cst = arith.constant dense<0.000000e+00> : vector<16x256xf32>
    %9 = tpu.matmul %8, %7, %cst {dimension_numbers = #tpu.dot_dimension_numbers<[1], [0], [0], [1], [0, 0, 1, 1], [], []>} : vector<16x4xf32>, vector<4x256xf32>, vector<16x256xf32> -> vector<16x256xf32>
    %c0_4 = arith.constant 0 : index
    %c0_5 = arith.constant 0 : index
    %10 = vector.load %arg4[%c0_4, %c0_5] : memref<16x1xf32, #tpu.memory_space<vmem>>, vector<16x1xf32>
    %11 = vector.broadcast %10 : vector<16x1xf32> to vector<16x256xf32>
    %12 = arith.addf %9, %11 : vector<16x256xf32>
    %c0_6 = arith.constant 0 : index
    %c0_7 = arith.constant 0 : index
    %13 = vector.load %arg10[%c0_6, %c0_7] : memref<16x256xf32, #tpu.memory_space<vmem>>, vector<16x256xf32>
    tpu.vector_store %arg10[%c0_6, %c0_7], %12 {strides = array<i32>} : memref<16x256xf32, #tpu.memory_space<vmem>>, vector<16x256xf32>,
    %c0_i32_8 = arith.constant 0 : i32
    %c8_i32 = arith.constant 8 : i32
    %14 = arith.muli %c0_i32_8, %c8_i32 : i32
    %15 = tpu.assume_multiple %14, 8 : i32
    %c8_i32_9 = arith.constant 8 : i32
    %16 = arith.muli %c0_i32_8, %c8_i32_9 : i32
    %c16_i32 = arith.constant 16 : i32
    %17 = arith.addi %c16_i32, %16 : i32
    %18 = tpu.assume_multiple %17, 8 : i32
    %19 = arith.index_cast %15 : i32 to index
    %c0_10 = arith.constant 0 : index
    %20 = vector.load %arg10[%19, %c0_10] : memref<16x256xf32, #tpu.memory_space<vmem>>, vector<8x256xf32>
    %21 = arith.index_cast %15 : i32 to index
    %c0_11 = arith.constant 0 : index
    %22 = vector.load %arg11[%21, %c0_11] : memref<32x256xf32, #tpu.memory_space<vmem>>, vector<8x256xf32>
    %23 = arith.index_cast %18 : i32 to index
    %c0_12 = arith.constant 0 : index
    %24 = vector.load %arg11[%23, %c0_12] : memref<32x256xf32, #tpu.memory_space<vmem>>, vector<8x256xf32>
    %cst_13 = arith.constant dense<0.000000e+00> : vector<256x256xf32>
    %25 = tpu.matmul %22, %20, %cst_13 {dimension_numbers = #tpu.dot_dimension_numbers<[0], [0], [1], [1], [0, 1, 1, 1], [], []>} : vector<8x256xf32>, vector<8x256xf32>, vector<256x256xf32> -> vector<256x256xf32>
    %cst_14 = arith.constant dense<0xFF800000> : vector<256xf32>
    %26 = vector.multi_reduction <maximumf>, %25, %cst_14 [0] : vector<256x256xf32> to vector<256xf32>
    %27 = vector.shape_cast %26 : vector<256xf32> to vector<1x256xf32>
    %28 = vector.broadcast %27 : vector<1x256xf32> to vector<256x256xf32>
    %29 = arith.subf %25, %28 : vector<256x256xf32>
    %30 = math.exp %29 : vector<256x256xf32>
    %cst_15 = arith.constant dense<0.000000e+00> : vector<256xf32>
    %31 = vector.multi_reduction <add>, %30, %cst_15 [0] : vector<256x256xf32> to vector<256xf32>
    %32 = vector.shape_cast %31 : vector<256xf32> to vector<1x256xf32>
    %cst_16 = arith.constant dense<0.000000e+00> : vector<8x256xf32>
    %33 = tpu.matmul %24, %30, %cst_16 {dimension_numbers = #tpu.dot_dimension_numbers<[1], [0], [0], [1], [0, 0, 1, 1], [], []>} : vector<8x256xf32>, vector<256x256xf32>, vector<8x256xf32> -> vector<8x256xf32>
    %cst_17 = arith.constant 1.000000e+00 : f32
    %34 = vector.broadcast %cst_17 : f32 to vector<1x256xf32>
    %35 = arith.divf %34, %32 : vector<1x256xf32>
    %36 = vector.broadcast %35 : vector<1x256xf32> to vector<8x256xf32>
    %37 = arith.mulf %33, %36 : vector<8x256xf32>
    %38 = arith.index_cast %15 : i32 to index
    %c0_18 = arith.constant 0 : index
    %39 = vector.load %arg12[%38, %c0_18] : memref<16x256xf32, #tpu.memory_space<vmem>>, vector<8x256xf32>
    tpu.vector_store %arg12[%38, %c0_18], %37 {strides = array<i32>} : memref<16x256xf32, #tpu.memory_space<vmem>>, vector<8x256xf32>,
    %c1_i32 = arith.constant 1 : i32
    %c8_i32_19 = arith.constant 8 : i32
    %40 = arith.muli %c1_i32, %c8_i32_19 : i32
    %41 = tpu.assume_multiple %40, 8 : i32
    %c8_i32_20 = arith.constant 8 : i32
    %42 = arith.muli %c1_i32, %c8_i32_20 : i32
    %c16_i32_21 = arith.constant 16 : i32
    %43 = arith.addi %c16_i32_21, %42 : i32
    %44 = tpu.assume_multiple %43, 8 : i32
    %45 = arith.index_cast %41 : i32 to index
    %c0_22 = arith.constant 0 : index
    %46 = vector.load %arg10[%45, %c0_22] : memref<16x256xf32, #tpu.memory_space<vmem>>, vector<8x256xf32>
    %47 = arith.index_cast %41 : i32 to index
    %c0_23 = arith.constant 0 : index
    %48 = vector.load %arg11[%47, %c0_23] : memref<32x256xf32, #tpu.memory_space<vmem>>, vector<8x256xf32>
    %49 = arith.index_cast %44 : i32 to index
    %c0_24 = arith.constant 0 : index
    %50 = vector.load %arg11[%49, %c0_24] : memref<32x256xf32, #tpu.memory_space<vmem>>, vector<8x256xf32>
    %cst_25 = arith.constant dense<0.000000e+00> : vector<256x256xf32>
    %51 = tpu.matmul %48, %46, %cst_25 {dimension_numbers = #tpu.dot_dimension_numbers<[0], [0], [1], [1], [0, 1, 1, 1], [], []>} : vector<8x256xf32>, vector<8x256xf32>, vector<256x256xf32> -> vector<256x256xf32>
    %cst_26 = arith.constant dense<0xFF800000> : vector<256xf32>
    %52 = vector.multi_reduction <maximumf>, %51, %cst_26 [0] : vector<256x256xf32> to vector<256xf32>
    %53 = vector.shape_cast %52 : vector<256xf32> to vector<1x256xf32>
    %54 = vector.broadcast %53 : vector<1x256xf32> to vector<256x256xf32>
    %55 = arith.subf %51, %54 : vector<256x256xf32>
    %56 = math.exp %55 : vector<256x256xf32>
    %cst_27 = arith.constant dense<0.000000e+00> : vector<256xf32>
    %57 = vector.multi_reduction <add>, %56, %cst_27 [0] : vector<256x256xf32> to vector<256xf32>
    %58 = vector.shape_cast %57 : vector<256xf32> to vector<1x256xf32>
    %cst_28 = arith.constant dense<0.000000e+00> : vector<8x256xf32>
    %59 = tpu.matmul %50, %56, %cst_28 {dimension_numbers = #tpu.dot_dimension_numbers<[1], [0], [0], [1], [0, 0, 1, 1], [], []>} : vector<8x256xf32>, vector<256x256xf32>, vector<8x256xf32> -> vector<8x256xf32>
    %cst_29 = arith.constant 1.000000e+00 : f32
    %60 = vector.broadcast %cst_29 : f32 to vector<1x256xf32>
    %61 = arith.divf %60, %58 : vector<1x256xf32>
    %62 = vector.broadcast %61 : vector<1x256xf32> to vector<8x256xf32>
    %63 = arith.mulf %59, %62 : vector<8x256xf32>
    %64 = arith.index_cast %41 : i32 to index
    %c0_30 = arith.constant 0 : index
    %65 = vector.load %arg12[%64, %c0_30] : memref<16x256xf32, #tpu.memory_space<vmem>>, vector<8x256xf32>
    tpu.vector_store %arg12[%64, %c0_30], %63 {strides = array<i32>} : memref<16x256xf32, #tpu.memory_space<vmem>>, vector<8x256xf32>,
    %c2_i32 = arith.constant 2 : i32
    %c0_31 = arith.constant 0 : index
    %c0_32 = arith.constant 0 : index
    %66 = vector.load %arg7[%c0_31, %c0_32] : memref<16x4xf32, #tpu.memory_space<vmem>>, vector<16x4xf32>
    %c0_33 = arith.constant 0 : index
    %c0_34 = arith.constant 0 : index
    %67 = vector.load %arg12[%c0_33, %c0_34] : memref<16x256xf32, #tpu.memory_space<vmem>>, vector<16x256xf32>
    %cst_35 = arith.constant dense<0.000000e+00> : vector<4x256xf32>
    %68 = tpu.matmul %66, %67, %cst_35 {dimension_numbers = #tpu.dot_dimension_numbers<[0], [0], [1], [1], [0, 1, 1, 1], [], []>} : vector<16x4xf32>, vector<16x256xf32>, vector<4x256xf32> -> vector<4x256xf32>
    %c0_36 = arith.constant 0 : index
    %c0_37 = arith.constant 0 : index
    %69 = vector.load %arg8[%c0_36, %c0_37] : memref<4x1xf32, #tpu.memory_space<vmem>>, vector<4x1xf32>
    %70 = vector.broadcast %69 : vector<4x1xf32> to vector<4x256xf32>
    %71 = arith.addf %68, %70 : vector<4x256xf32>
    %72 = arith.addf %71, %7 : vector<4x256xf32>
    %c0_38 = arith.constant 0 : index
    %c0_39 = arith.constant 0 : index
    %c0_40 = arith.constant 0 : index
    %73 = vector.load %arg9[%c0_38, %c0_39, %c0_40] : memref<1x4x256xf32, #tpu.memory_space<vmem>>, vector<1x4x256xf32>
    %74 = vector.shape_cast %73 : vector<1x4x256xf32> to vector<4x256xf32>
    %75 = vector.shape_cast %72 : vector<4x256xf32> to vector<1x4x256xf32>
    tpu.vector_store %arg9[%c0_38, %c0_39, %c0_40], %75 {strides = array<i32>} : memref<1x4x256xf32, #tpu.memory_space<vmem>>, vector<1x4x256xf32>,
    return
  }
  func.func @transform_0(%arg0: i32, %arg1: i32) -> (i32, i32, i32) {
    %c0_i32 = arith.constant 0 : i32
    %c0_i32_0 = arith.constant 0 : i32
    %c0_i32_1 = arith.constant 0 : i32
    return %arg0, %c0_i32, %c0_i32_0 : i32, i32, i32
  }
  func.func @transform_1(%arg0: i32, %arg1: i32) -> (i32, i32) {
    %c0_i32 = arith.constant 0 : i32
    %c0_i32_0 = arith.constant 0 : i32
    %c0_i32_1 = arith.constant 0 : i32
    return %c0_i32, %c0_i32_0 : i32, i32
  }
  func.func @transform_2(%arg0: i32, %arg1: i32) -> (i32, i32) {
    %c0_i32 = arith.constant 0 : i32
    %c0_i32_0 = arith.constant 0 : i32
    %c0_i32_1 = arith.constant 0 : i32
    return %c0_i32, %c0_i32_0 : i32, i32
  }
  func.func @transform_3(%arg0: i32, %arg1: i32) -> (i32, i32) {
    %c0_i32 = arith.constant 0 : i32
    %c0_i32_0 = arith.constant 0 : i32
    %c0_i32_1 = arith.constant 0 : i32
    return %c0_i32, %c0_i32_0 : i32, i32
  }
  func.func @transform_4(%arg0: i32, %arg1: i32) -> (i32, i32) {
    %c0_i32 = arith.constant 0 : i32
    %c0_i32_0 = arith.constant 0 : i32
    %c0_i32_1 = arith.constant 0 : i32
    return %c0_i32, %c0_i32_0 : i32, i32
  }
  func.func @transform_5(%arg0: i32, %arg1: i32) -> (i32, i32) {
    %c0_i32 = arith.constant 0 : i32
    %c0_i32_0 = arith.constant 0 : i32
    %c0_i32_1 = arith.constant 0 : i32
    return %c0_i32, %c0_i32_0 : i32, i32
  }
  func.func @transform_6(%arg0: i32, %arg1: i32) -> (i32, i32) {
    %c0_i32 = arith.constant 0 : i32
    %c0_i32_0 = arith.constant 0 : i32
    %c0_i32_1 = arith.constant 0 : i32
    return %c0_i32, %c0_i32_0 : i32, i32
  }
  func.func @transform_7(%arg0: i32, %arg1: i32) -> (i32, i32, i32) {
    %c0_i32 = arith.constant 0 : i32
    %c0_i32_0 = arith.constant 0 : i32
    return %arg0, %c0_i32, %arg1 : i32, i32, i32
  }
}

</mosaic_0001>

<llo_original>
// kernel: tpu_custom_call.1
$region0: #{tpu_custom_call.1}
  #allocation0 [shape = 'u32[]', space=smem, size = 0x4, offset = 0x4, fixed_abs, tag = 'smem constant byte address 0x4 - core index']
  #allocation1 [shape = 'u32[144,128]{1,0:T(1,128)}', space=vmem, size = 0x12000, scoped, tag = 'internal scratch']
  #allocation2 [shape = 'f32[16,256]{1,0:T(8,128)}', space=vmem, size = 0x4000, scoped, tag = 'scratch operand']
  #allocation3 [shape = 'f32[32,256]{1,0:T(8,128)}', space=vmem, size = 0x8000, scoped, tag = 'scratch operand']
  #allocation4 [shape = 'f32[16,256]{1,0:T(8,128)}', space=vmem, size = 0x4000, scoped, tag = 'scratch operand']
  %s0 = inlined_call_operand.vmem [shape: f32[2,4,256], index: 0, kind: input, shape index: {}]
  %s1 = inlined_call_operand.vmem [shape: f32[16,4], index: 1, kind: input, shape index: {}]
  %s2 = inlined_call_operand.vmem [shape: f32[16,1], index: 2, kind: input, shape index: {}]
  %s3 = inlined_call_operand.vmem [shape: f32[32,4], index: 3, kind: input, shape index: {}]
  %s4 = inlined_call_operand.vmem [shape: f32[32,1], index: 4, kind: input, shape index: {}]
  %s5 = inlined_call_operand.vmem [shape: f32[16,4], index: 5, kind: input, shape index: {}]
  %s6 = inlined_call_operand.vmem [shape: f32[4,1], index: 6, kind: input, shape index: {}]
  %s7 = inlined_call_operand.hbm [shape: f32[2,4,256], index: 7, kind: output, shape index: {}]
  %s8 = sld [smem:[#allocation0]]
  $region65: #{tpu_custom_call.1} parent=0
    _
  %s10 = ssub.s32 1, %s8
  %s11 = scalar_select 0, %s10, %s8
  $region1: #{tpu_custom_call.1} parent=0
    #allocation5 [shape = 'u8[8192]{0}', space=vmem, size = 0x2000, scoped, tag = 'output window, operand 0']
    #allocation6 [shape = 's32[2]{0}', space=sflag, size = 0x8, scoped, tag = 'scoped memory for tpu_custom_call.1']
    %12 = vsyncpa [#allocation6], 0
    %s13 = scalar_lea.sflag [#allocation6], 1
    %14 = vsyncpa %s13, 0
    loop: start=0, step=1, limit=4
    $region2: #{tpu_custom_call.1} parent=1 // loop_pre_header
      _
    $region3: #{tpu_custom_call.1} parent=1 // loop_header
      %s16 = sphi 0, %s20
      %p17 = scmp.ge.s32.totalorder %s16, 4
      %s23 = sphi 0, %s35
      %s24 = sphi 0, %s31
      %s25 = sphi 0, %s23
      %s26 = sphi 0, %s24
      %s27 = sphi 0, %s25
      %s28 = sphi 0, %s26
      %s38 = sphi 0, %s40
      %s41 = sphi 0, %s38
      %s42 = sphi 0, %s41
      %s58 = sphi 0, %s42
      %s62 = sphi 0, %s62
      %s64 = sphi 0, %s62
      %s65 = sphi 0, %s64
      %s79 = sphi 0, %s65
      %s83 = sphi 0, %s83
      %s85 = sphi 0, %s83
      %s86 = sphi 0, %s85
      %s100 = sphi 0, %s86
      %s104 = sphi 0, %s104
      %s106 = sphi 0, %s104
      %s107 = sphi 0, %s106
      %s121 = sphi 0, %s107
      %s125 = sphi 0, %s125
      %s127 = sphi 0, %s125
      %s128 = sphi 0, %s127
      %s142 = sphi 0, %s128
      %s146 = sphi 0, %s146
      %s148 = sphi 0, %s146
      %s149 = sphi 0, %s148
      %s163 = sphi 0, %s149
      %s167 = sphi 0, %s167
      %s169 = sphi 0, %s167
      %s170 = sphi 0, %s169
      %s184 = sphi 0, %s170
      %s192 = sphi 0, %s194
      %s195 = sphi 0, %s192
      %s196 = sphi 0, %s195
      %s212 = sphi 0, %s196
    $region4: #{tpu_custom_call.1} parent=1 // loop_header_branch
      %19 = sbr.rel (%p17) target = $region8
    $region5: #{tpu_custom_call.1} parent=1 // loop_body
      %s21 = ssub.s32 %s16, 1
      %s22 = ssub.s32 %s16, 2
      %s29 = sadd.s32 1, %s24
      %p30 = scmp.ge.s32.totalorder %s29, 1
      %s31 = scalar_select %p30, 0, %s29
      %s32 = sadd.s32 1, %s23
      %s33 = scalar_select %p30, %s32, %s23
      %p34 = scmp.ge.s32.totalorder %s33, 2
      %s35 = scalar_select %p34, 0, %s33
      %s36 = ssub.s32 %s23, %s35
      %p37 = scmp.eq.s32.totalorder %s36, 0
      %s39 = sadd.s32 %s38, 1
      %s40 = scalar_select %p37, %s38, %s39
      %p43 = pneg %p37
      %p44 = scmp.eq.s32.totalorder %s16, 1
      %p45 = por %p43, %p44
      %p46 = scmp.ne.s32.totalorder %s38, %s41
      %p47 = scmp.eq.s32.totalorder %s16, 0
      %p48 = por %p46, %p47
      %p49 = scmp.ne.s32.totalorder %s38, %s41
      %p50 = scmp.eq.s32.totalorder %s21, 1
      %p51 = por %p49, %p50
      %p52 = scmp.ne.s32.totalorder %s41, %s42
      %p53 = scmp.eq.s32.totalorder %s21, 0
      %p54 = por %p52, %p53
      %p55 = scmp.ne.s32.totalorder %s41, %s42
      %p56 = scmp.eq.s32.totalorder %s22, 1
      %p57 = por %p55, %p56
      %p59 = scmp.ne.s32.totalorder %s42, %s58
      %p60 = scmp.eq.s32.totalorder %s22, 0
      %p61 = por %p59, %p60
      %s63 = sadd.s32 %s62, 1
      %p66 = scmp.eq.s32.totalorder %s16, 1
      %p67 = scmp.ne.s32.totalorder %s62, %s64
      %p68 = scmp.eq.s32.totalorder %s16, 0
      %p69 = por %p67, %p68
      %p70 = scmp.ne.s32.totalorder %s62, %s64
      %p71 = scmp.eq.s32.totalorder %s21, 1
      %p72 = por %p70, %p71
      %p73 = scmp.ne.s32.totalorder %s64, %s65
      %p74 = scmp.eq.s32.totalorder %s21, 0
      %p75 = por %p73, %p74
      %p76 = scmp.ne.s32.totalorder %s64, %s65
      %p77 = scmp.eq.s32.totalorder %s22, 1
      %p78 = por %p76, %p77
      %p80 = scmp.ne.s32.totalorder %s65, %s79
      %p81 = scmp.eq.s32.totalorder %s22, 0
      %p82 = por %p80, %p81
      %s84 = sadd.s32 %s83, 1
      %p87 = scmp.eq.s32.totalorder %s16, 1
      %p88 = scmp.ne.s32.totalorder %s83, %s85
      %p89 = scmp.eq.s32.totalorder %s16, 0
      %p90 = por %p88, %p89
      %p91 = scmp.ne.s32.totalorder %s83, %s85
      %p92 = scmp.eq.s32.totalorder %s21, 1
      %p93 = por %p91, %p92
      %p94 = scmp.ne.s32.totalorder %s85, %s86
      %p95 = scmp.eq.s32.totalorder %s21, 0
      %p96 = por %p94, %p95
      %p97 = scmp.ne.s32.totalorder %s85, %s86
      %p98 = scmp.eq.s32.totalorder %s22, 1
      %p99 = por %p97, %p98
      %p101 = scmp.ne.s32.totalorder %s86, %s100
      %p102 = scmp.eq.s32.totalorder %s22, 0
      %p103 = por %p101, %p102
      %s105 = sadd.s32 %s104, 1
      %p108 = scmp.eq.s32.totalorder %s16, 1
      %p109 = scmp.ne.s32.totalorder %s104, %s106
      %p110 = scmp.eq.s32.totalorder %s16, 0
      %p111 = por %p109, %p110
      %p112 = scmp.ne.s32.totalorder %s104, %s106
      %p113 = scmp.eq.s32.totalorder %s21, 1
      %p114 = por %p112, %p113
      %p115 = scmp.ne.s32.totalorder %s106, %s107
      %p116 = scmp.eq.s32.totalorder %s21, 0
      %p117 = por %p115, %p116
      %p118 = scmp.ne.s32.totalorder %s106, %s107
      %p119 = scmp.eq.s32.totalorder %s22, 1
      %p120 = por %p118, %p119
      %p122 = scmp.ne.s32.totalorder %s107, %s121
      %p123 = scmp.eq.s32.totalorder %s22, 0
      %p124 = por %p122, %p123
      %s126 = sadd.s32 %s125, 1
      %p129 = scmp.eq.s32.totalorder %s16, 1
      %p130 = scmp.ne.s32.totalorder %s125, %s127
      %p131 = scmp.eq.s32.totalorder %s16, 0
      %p132 = por %p130, %p131
      %p133 = scmp.ne.s32.totalorder %s125, %s127
      %p134 = scmp.eq.s32.totalorder %s21, 1
      %p135 = por %p133, %p134
      %p136 = scmp.ne.s32.totalorder %s127, %s128
      %p137 = scmp.eq.s32.totalorder %s21, 0
      %p138 = por %p136, %p137
      %p139 = scmp.ne.s32.totalorder %s127, %s128
      %p140 = scmp.eq.s32.totalorder %s22, 1
      %p141 = por %p139, %p140
      %p143 = scmp.ne.s32.totalorder %s128, %s142
      %p144 = scmp.eq.s32.totalorder %s22, 0
      %p145 = por %p143, %p144
      %s147 = sadd.s32 %s146, 1
      %p150 = scmp.eq.s32.totalorder %s16, 1
      %p151 = scmp.ne.s32.totalorder %s146, %s148
      %p152 = scmp.eq.s32.totalorder %s16, 0
      %p153 = por %p151, %p152
      %p154 = scmp.ne.s32.totalorder %s146, %s148
      %p155 = scmp.eq.s32.totalorder %s21, 1
      %p156 = por %p154, %p155
      %p157 = scmp.ne.s32.totalorder %s148, %s149
      %p158 = scmp.eq.s32.totalorder %s21, 0
      %p159 = por %p157, %p158
      %p160 = scmp.ne.s32.totalorder %s148, %s149
      %p161 = scmp.eq.s32.totalorder %s22, 1
      %p162 = por %p160, %p161
      %p164 = scmp.ne.s32.totalorder %s149, %s163
      %p165 = scmp.eq.s32.totalorder %s22, 0
      %p166 = por %p164, %p165
      %s168 = sadd.s32 %s167, 1
      %p171 = scmp.eq.s32.totalorder %s16, 1
      %p172 = scmp.ne.s32.totalorder %s167, %s169
      %p173 = scmp.eq.s32.totalorder %s16, 0
      %p174 = por %p172, %p173
      %p175 = scmp.ne.s32.totalorder %s167, %s169
      %p176 = scmp.eq.s32.totalorder %s21, 1
      %p177 = por %p175, %p176
      %p178 = scmp.ne.s32.totalorder %s169, %s170
      %p179 = scmp.eq.s32.totalorder %s21, 0
      %p180 = por %p178, %p179
      %p181 = scmp.ne.s32.totalorder %s169, %s170
      %p182 = scmp.eq.s32.totalorder %s22, 1
      %p183 = por %p181, %p182
      %p185 = scmp.ne.s32.totalorder %s170, %s184
      %p186 = scmp.eq.s32.totalorder %s22, 0
      %p187 = por %p185, %p186
      %s188 = ssub.s32 %s23, %s35
      %s189 = ssub.s32 %s24, %s31
      %s190 = sor.u32 %s188, %s189
      %p191 = scmp.eq.s32.totalorder %s190, 0
      %s193 = sadd.s32 %s192, 1
      %s194 = scalar_select %p191, %s192, %s193
      %p197 = pneg %p191
      %p198 = scmp.eq.s32.totalorder %s16, 1
      %p199 = por %p197, %p198
      %p200 = scmp.ne.s32.totalorder %s192, %s195
      %p201 = scmp.eq.s32.totalorder %s16, 0
      %p202 = por %p200, %p201
      %p203 = scmp.ne.s32.totalorder %s192, %s195
      %p204 = scmp.eq.s32.totalorder %s21, 1
      %p205 = por %p203, %p204
      %p206 = scmp.ne.s32.totalorder %s195, %s196
      %p207 = scmp.eq.s32.totalorder %s21, 0
      %p208 = por %p206, %p207
      %p209 = scmp.ne.s32.totalorder %s195, %s196
      %p210 = scmp.eq.s32.totalorder %s22, 1
      %p211 = por %p209, %p210
      %p213 = scmp.ne.s32.totalorder %s196, %s212
      %p214 = scmp.eq.s32.totalorder %s22, 0
      %p215 = por %p213, %p214
      %p216 = scmp.le.s32.totalorder 1, %s16
      %p217 = scmp.lt.s32.totalorder %s16, 3
      %p218 = pnand %p216, %p217
      %p219 = pneg %p218
      // Predicated region
      $region9: #{tpu_custom_call.1} parent=5 // pred_check
        _
      $region10: #{tpu_custom_call.1} parent=5 // pred_check_branch
        %221 = sbr.rel (%p218) target = $region12
      $region11: #{tpu_custom_call.1} parent=5 // pred_region
        %s222 = ssub.s32 %s16, 1
        // Predicated region
        $region13: #{tpu_custom_call.1} parent=11 // pred_check
          %p223 = pneg %p75
        $region14: #{tpu_custom_call.1} parent=11 // pred_check_branch
          %225 = sbr.rel (%p223) target = $region16
        $region15: #{tpu_custom_call.1} parent=11 // pred_region
          _
        $region16: #{tpu_custom_call.1} parent=11 // pred_fallthru
          _
        // Predicated region
        $region17: #{tpu_custom_call.1} parent=11 // pred_check
          %p226 = pneg %p96
        $region18: #{tpu_custom_call.1} parent=11 // pred_check_branch
          %228 = sbr.rel (%p226) target = $region20
        $region19: #{tpu_custom_call.1} parent=11 // pred_region
          _
        $region20: #{tpu_custom_call.1} parent=11 // pred_fallthru
          _
        // Predicated region
        $region21: #{tpu_custom_call.1} parent=11 // pred_check
          %p229 = pneg %p117
        $region22: #{tpu_custom_call.1} parent=11 // pred_check_branch
          %231 = sbr.rel (%p229) target = $region24
        $region23: #{tpu_custom_call.1} parent=11 // pred_region
          _
        $region24: #{tpu_custom_call.1} parent=11 // pred_fallthru
          _
        // Predicated region
        $region25: #{tpu_custom_call.1} parent=11 // pred_check
          %p232 = pneg %p138
        $region26: #{tpu_custom_call.1} parent=11 // pred_check_branch
          %234 = sbr.rel (%p232) target = $region28
        $region27: #{tpu_custom_call.1} parent=11 // pred_region
          _
        $region28: #{tpu_custom_call.1} parent=11 // pred_fallthru
          _
        // Predicated region
        $region29: #{tpu_custom_call.1} parent=11 // pred_check
          %p235 = pneg %p159
        $region30: #{tpu_custom_call.1} parent=11 // pred_check_branch
          %237 = sbr.rel (%p235) target = $region32
        $region31: #{tpu_custom_call.1} parent=11 // pred_region
          _
        $region32: #{tpu_custom_call.1} parent=11 // pred_fallthru
          _
        // Predicated region
        $region33: #{tpu_custom_call.1} parent=11 // pred_check
          %p238 = pneg %p180
        $region34: #{tpu_custom_call.1} parent=11 // pred_check_branch
          %240 = sbr.rel (%p238) target = $region36
        $region35: #{tpu_custom_call.1} parent=11 // pred_region
          _
        $region36: #{tpu_custom_call.1} parent=11 // pred_fallthru
          _
      $region12: #{tpu_custom_call.1} parent=5 // pred_fallthru
        _
      %p241 = scmp.lt.s32.totalorder %s16, 2
      // Predicated region
      $region37: #{tpu_custom_call.1} parent=5 // pred_check
        %p242 = pneg %p241
      $region38: #{tpu_custom_call.1} parent=5 // pred_check_branch
        %244 = sbr.rel (%p242) target = $region40
      $region39: #{tpu_custom_call.1} parent=5 // pred_region
        // Predicated region
        $region41: #{tpu_custom_call.1} parent=39 // pred_check
          %p245 = pneg %p48
        $region42: #{tpu_custom_call.1} parent=39 // pred_check_branch
          %247 = sbr.rel (%p245) target = $region44
        $region43: #{tpu_custom_call.1} parent=39 // pred_region
          %p248 = scmp.lt.s32.totalorder %s23, 1
          %s249 = scalar_select %p248, %s23, 1
          %s250 = smul.addr %s249, 2
          %s251 = smul.addr %s250, 4
          %s252 = scalar_lea.vmem %s0, %s251
        $region44: #{tpu_custom_call.1} parent=39 // pred_fallthru
          _
      $region40: #{tpu_custom_call.1} parent=5 // pred_fallthru
        _
      %p253 = scmp.le.s32.totalorder 1, %s16
      %p254 = scmp.lt.s32.totalorder %s16, 3
      %p255 = pnand %p253, %p254
      %p256 = pneg %p255
      // Predicated region
      $region45: #{tpu_custom_call.1} parent=5 // pred_check
        _
      $region46: #{tpu_custom_call.1} parent=5 // pred_check_branch
        %258 = sbr.rel (%p255) target = $region48
      $region47: #{tpu_custom_call.1} parent=5 // pred_region
        %s259 = ssub.s32 %s16, 1
        %p260 = scmp.lt.s32.totalorder %s25, 1
        %s261 = scalar_select %p260, %s25, 1
        %s262 = smul.addr %s261, 2
        %s263 = smul.addr %s262, 4
        %s264 = scalar_lea.vmem %s0, %s263
        %p265 = pneg %p54
        %p266 = pneg %p51
        %p267 = pneg %p75
        %p268 = pneg %p72
        %p269 = pneg %p96
        %p270 = pneg %p93
        %p271 = pneg %p117
        %p272 = pneg %p114
        %p273 = pneg %p138
        %p274 = pneg %p135
        %p275 = pneg %p159
        %p276 = pneg %p156
        %p277 = pneg %p180
        %p278 = pneg %p177
        %p279 = pneg %p208
        %p280 = pneg %p205
        %s281 = sand.u32 %s195, 1
        %s282 = scalar_lea.sflag [#allocation6], %s281
        %s283 = sand.u32 %s195, 1
        %s284 = smul.addr %s283, 8
        %s285 = scalar_lea.vmem [#allocation5], %s284
        %p286 = scmp.lt.s32.totalorder %s25, 1
        %s287 = scalar_select %p286, %s25, 1
        %s288 = smul.addr %s287, 2
        %s289 = smul.addr %s288, 4
        %s290 = scalar_lea.vmem %s0, %s289
        %s291 = smul.u32 2, %s26
        %p292 = scmp.eq.s32.totalorder %s26, 0
        // Predicated region
        $region49: #{tpu_custom_call.1} parent=47 // pred_check
          %p293 = pneg %p292
        $region50: #{tpu_custom_call.1} parent=47 // pred_check_branch
          %295 = sbr.rel (%p293) target = $region52
        $region51: #{tpu_custom_call.1} parent=47 // pred_region
          %v296 = vld [vmem:[%s290] sm:$0xff]
          %v297 = vld [vmem:[%s3] sm:$0xff]
          %v298 = vld [vmem:[%s3 + $0x8] sm:$0xff]
          %v299 = vld [vmem:[%s3 + $0x10] sm:$0xff]
          %v300 = vld [vmem:[%s3 + $0x18] sm:$0xff]
          %v301 = vld [vmem:[%s4] sm:$0xff]
          %v302 = vld [vmem:[%s4 + $0x8] sm:$0xff]
          %v303 = vld [vmem:[%s4 + $0x10] sm:$0xff]
          %v304 = vld [vmem:[%s4 + $0x18] sm:$0xff]
          %306 = vset.pattern.permute.xlu0 0
          %307 = vperm.xlu0 %306, %v301
          %v308 = vpop.permute.xlu0 %307
          %311 = vset.pattern.permute.xlu0 0
          %312 = vperm.xlu0 %311, %v302
          %v313 = vpop.permute.xlu0 %312
          %316 = vset.pattern.permute.xlu0 0
          %317 = vperm.xlu0 %316, %v303
          %v318 = vpop.permute.xlu0 %317
          %321 = vset.pattern.permute.xlu0 0
          %322 = vperm.xlu0 %321, %v304
          %v323 = vpop.permute.xlu0 %322
          %v326 = vcombine.high %v296, %v296
          %vm327 = vcmask 31744
          %v329 = vsel %vm327, %v297, 0
          %v332 = vsel %vm327, %v298, 0
          %v335 = vsel %vm327, %v299, 0
          %v338 = vsel %vm327, %v300, 0
          %vm340 = vcmask 1043456
          %v341 = vsel %vm340, %v296, 0
          %v343 = vsel %vm340, %v326, 0
          %345 = vmatprep.subr.mxu0 %v343
          %346 = vmatpush1.msra.mxu0 %v341
          %347 = vmatprep.subr.mxu0 0.0
          %348 = vmatpush1.msra.mxu0 0.0
          %349 = vmatprep.subr.mxu0 0.0
          %350 = vmatpush1.msra.mxu0 0.0
          %351 = vmatprep.subr.mxu0 0.0
          %352 = vmatpush1.msra.mxu0 0.0
          %353 = vmatprep.subr.mxu0 0.0
          %354 = vmatpush1.msra.mxu0 0.0
          %355 = vmatprep.subr.mxu0 0.0
          %356 = vmatpush1.msra.mxu0 0.0
          %357 = vmatprep.subr.mxu0 0.0
          %358 = vmatpush1.msra.mxu0 0.0
          %359 = vmatprep.subr.mxu0 0.0
          %360 = vmatpush1.msra.mxu0 0.0
          %361 = vmatprep.subr.mxu0 0.0
          %362 = vmatpush1.msra.mxu0 0.0
          %363 = vmatprep.subr.mxu0 0.0
          %364 = vmatpush1.msra.mxu0 0.0
          %365 = vmatprep.subr.mxu0 0.0
          %366 = vmatpush1.msra.mxu0 0.0
          %367 = vmatprep.subr.mxu0 0.0
          %368 = vmatpush1.msra.mxu0 0.0
          %369 = vmatprep.subr.mxu0 0.0
          %370 = vmatpush1.msra.mxu0 0.0
          %371 = vmatprep.subr.mxu0 0.0
          %372 = vmatpush1.msra.mxu0 0.0
          %373 = vmatprep.subr.mxu0 0.0
          %374 = vmatpush1.msra.mxu0 0.0
          %375 = vmatprep.subr.mxu0 0.0
          %376 = vmatpush1.msra.mxu0 0.0
          %377 = vmatprep.subr.mxu0 0.0
          %378 = vmatpush1.msra.mxu0 0.0
          %379 = vmatprep.subr.mxu0 0.0
          %380 = vmatpush1.msra.mxu0 0.0
          %381 = vmatprep.subr.mxu0 0.0
          %382 = vmatpush1.msra.mxu0 0.0
          %383 = vmatprep.subr.mxu0 0.0
          %384 = vmatpush1.msra.mxu0 0.0
          %385 = vmatprep.subr.mxu0 0.0
          %386 = vmatpush1.msra.mxu0 0.0
          %387 = vmatprep.subr.mxu0 0.0
          %388 = vmatpush1.msra.mxu0 0.0
          %389 = vmatprep.subr.mxu0 0.0
          %390 = vmatpush1.msra.mxu0 0.0
          %391 = vmatprep.subr.mxu0 0.0
          %392 = vmatpush1.msra.mxu0 0.0
          %393 = vmatprep.subr.mxu0 0.0
          %394 = vmatpush1.msra.mxu0 0.0
          %395 = vmatprep.subr.mxu0 0.0
          %396 = vmatpush1.msra.mxu0 0.0
          %397 = vmatprep.subr.mxu0 0.0
          %398 = vmatpush1.msra.mxu0 0.0
          %399 = vmatprep.subr.mxu0 0.0
          %400 = vmatpush1.msra.mxu0 0.0
          %401 = vmatprep.subr.mxu0 0.0
          %402 = vmatpush1.msra.mxu0 0.0
          %403 = vmatprep.subr.mxu0 0.0
          %404 = vmatpush1.msra.mxu0 0.0
          %405 = vmatprep.subr.mxu0 0.0
          %406 = vmatpush1.msra.mxu0 0.0
          %407 = vmatprep.subr.mxu0 0.0
          %408 = vmatpush1.msra.mxu0 0.0
          %409 = vmatprep.mubr.f32.mxu0 0.0
          %410 = vmatmul.mubr.f32.gmra.mrb[0].mxu0 %v329
          %v411 = vpop.f32.mrb[0].mxu0
          %v412 = vadd.f32 %v308, %v411
          %v413 = vpop.f32.mrb[0].mxu0
          %v414 = vadd.f32 %v308, %v413
          %415 = vmatprep.mubr.f32.mxu0 0.0
          %416 = vmatmul.mubr.f32.gmra.mrb[0].mxu0 %v332
          %v417 = vpop.f32.mrb[0].mxu0
          %v418 = vadd.f32 %v313, %v417
          %v419 = vpop.f32.mrb[0].mxu0
          %v420 = vadd.f32 %v313, %v419
          %421 = vmatprep.mubr.f32.mxu0 0.0
          %422 = vmatmul.mubr.f32.gmra.mrb[0].mxu0 %v335
          %v423 = vpop.f32.mrb[0].mxu0
          %v424 = vadd.f32 %v318, %v423
          %v425 = vpop.f32.mrb[0].mxu0
          %v426 = vadd.f32 %v318, %v425
          %427 = vmatprep.mubr.f32.mxu0 0.0
          %428 = vmatmul.mubr.f32.gmra.mrb[0].mxu0 %v338
          %v429 = vpop.f32.mrb[0].mxu0
          %v430 = vadd.f32 %v323, %v429
          %v431 = vpop.f32.mrb[0].mxu0
          %v432 = vadd.f32 %v323, %v431
          %433 = vdwg.mxu0
          %434 = vst [vmem:[#allocation3] sm:$0xff] %v412
          %435 = vst [vmem:[#allocation3 + $0x8] sm:$0xff] %v414
          %436 = vst [vmem:[#allocation3 + $0x10] sm:$0xff] %v418
          %437 = vst [vmem:[#allocation3 + $0x18] sm:$0xff] %v420
          %438 = vst [vmem:[#allocation3 + $0x20] sm:$0xff] %v424
          %439 = vst [vmem:[#allocation3 + $0x28] sm:$0xff] %v426
          %440 = vst [vmem:[#allocation3 + $0x30] sm:$0xff] %v430
          %441 = vst [vmem:[#allocation3 + $0x38] sm:$0xff] %v432
        $region52: #{tpu_custom_call.1} parent=47 // pred_fallthru
          _
        %s442 = smul.u32 %s26, 256
        %s443 = sshra.s32 %s442, 7
        %s444 = sand.u32 %s442, 127
        %s445 = smul.addr %s443, 4
        %s446 = scalar_lea.vmem %s290, %s445
        %v447 = vld [vmem:[%s446] sm:$0xff]
        %v448 = vld [vmem:[%s1] sm:$0xff]
        %v449 = vld [vmem:[%s1 + $0x8] sm:$0xff]
        %v450 = vld [vmem:[%s2] sm:$0xff]
        %v451 = vld [vmem:[%s2 + $0x8] sm:$0xff]
        %453 = vset.pattern.permute.xlu0 0
        %454 = vperm.xlu0 %453, %v450
        %v455 = vpop.permute.xlu0 %454
        %458 = vset.pattern.permute.xlu0 0
        %459 = vperm.xlu0 %458, %v451
        %v460 = vpop.permute.xlu0 %459
        %v463 = vcombine.high %v447, %v447
        %vm464 = vcmask 31744
        %v466 = vsel %vm464, %v448, 0
        %v469 = vsel %vm464, %v449, 0
        %vm471 = vcmask 1043456
        %v472 = vsel %vm471, %v447, 0
        %v474 = vsel %vm471, %v463, 0
        %476 = vmatprep.subr.mxu0 %v474
        %477 = vmatpush1.msra.mxu0 %v472
        %478 = vmatprep.subr.mxu0 0.0
        %479 = vmatpush1.msra.mxu0 0.0
        %480 = vmatprep.subr.mxu0 0.0
        %481 = vmatpush1.msra.mxu0 0.0
        %482 = vmatprep.subr.mxu0 0.0
        %483 = vmatpush1.msra.mxu0 0.0
        %484 = vmatprep.subr.mxu0 0.0
        %485 = vmatpush1.msra.mxu0 0.0
        %486 = vmatprep.subr.mxu0 0.0
        %487 = vmatpush1.msra.mxu0 0.0
        %488 = vmatprep.subr.mxu0 0.0
        %489 = vmatpush1.msra.mxu0 0.0
        %490 = vmatprep.subr.mxu0 0.0
        %491 = vmatpush1.msra.mxu0 0.0
        %492 = vmatprep.subr.mxu0 0.0
        %493 = vmatpush1.msra.mxu0 0.0
        %494 = vmatprep.subr.mxu0 0.0
        %495 = vmatpush1.msra.mxu0 0.0
        %496 = vmatprep.subr.mxu0 0.0
        %497 = vmatpush1.msra.mxu0 0.0
        %498 = vmatprep.subr.mxu0 0.0
        %499 = vmatpush1.msra.mxu0 0.0
        %500 = vmatprep.subr.mxu0 0.0
        %501 = vmatpush1.msra.mxu0 0.0
        %502 = vmatprep.subr.mxu0 0.0
        %503 = vmatpush1.msra.mxu0 0.0
        %504 = vmatprep.subr.mxu0 0.0
        %505 = vmatpush1.msra.mxu0 0.0
        %506 = vmatprep.subr.mxu0 0.0
        %507 = vmatpush1.msra.mxu0 0.0
        %508 = vmatprep.subr.mxu0 0.0
        %509 = vmatpush1.msra.mxu0 0.0
        %510 = vmatprep.subr.mxu0 0.0
        %511 = vmatpush1.msra.mxu0 0.0
        %512 = vmatprep.subr.mxu0 0.0
        %513 = vmatpush1.msra.mxu0 0.0
        %514 = vmatprep.subr.mxu0 0.0
        %515 = vmatpush1.msra.mxu0 0.0
        %516 = vmatprep.subr.mxu0 0.0
        %517 = vmatpush1.msra.mxu0 0.0
        %518 = vmatprep.subr.mxu0 0.0
        %519 = vmatpush1.msra.mxu0 0.0
        %520 = vmatprep.subr.mxu0 0.0
        %521 = vmatpush1.msra.mxu0 0.0
        %522 = vmatprep.subr.mxu0 0.0
        %523 = vmatpush1.msra.mxu0 0.0
        %524 = vmatprep.subr.mxu0 0.0
        %525 = vmatpush1.msra.mxu0 0.0
        %526 = vmatprep.subr.mxu0 0.0
        %527 = vmatpush1.msra.mxu0 0.0
        %528 = vmatprep.subr.mxu0 0.0
        %529 = vmatpush1.msra.mxu0 0.0
        %530 = vmatprep.subr.mxu0 0.0
        %531 = vmatpush1.msra.mxu0 0.0
        %532 = vmatprep.subr.mxu0 0.0
        %533 = vmatpush1.msra.mxu0 0.0
        %534 = vmatprep.subr.mxu0 0.0
        %535 = vmatpush1.msra.mxu0 0.0
        %536 = vmatprep.subr.mxu0 0.0
        %537 = vmatpush1.msra.mxu0 0.0
        %538 = vmatprep.subr.mxu0 0.0
        %539 = vmatpush1.msra.mxu0 0.0
        %540 = vmatprep.mubr.f32.mxu0 0.0
        %541 = vmatmul.mubr.f32.gmra.mrb[0].mxu0 %v466
        %v542 = vpop.f32.mrb[0].mxu0
        %v543 = vadd.f32 %v455, %v542
        %v544 = vpop.f32.mrb[0].mxu0
        %v545 = vadd.f32 %v455, %v544
        %546 = vmatprep.mubr.f32.mxu0 0.0
        %547 = vmatmul.mubr.f32.gmra.mrb[0].mxu0 %v469
        %v548 = vpop.f32.mrb[0].mxu0
        %v549 = vadd.f32 %v460, %v548
        %v550 = vpop.f32.mrb[0].mxu0
        %v551 = vadd.f32 %v460, %v550
        %552 = vdwg.mxu0
        %553 = vst [vmem:[#allocation2] sm:$0xff] %v543
        %554 = vst [vmem:[#allocation2 + $0x8] sm:$0xff] %v545
        %555 = vst [vmem:[#allocation2 + $0x10] sm:$0xff] %v549
        %556 = vst [vmem:[#allocation2 + $0x18] sm:$0xff] %v551
        %s557 = smul.u32 0, 2
        %s558 = smul.addr %s557, 8
        %s559 = scalar_lea.vmem [#allocation2], %s558
        %v560 = vld [vmem:[%s559] sm:$0xff]
        %v561 = vld [vmem:[%s559 + $0x8] sm:$0xff]
        %s562 = smul.addr %s557, 8
        %s563 = scalar_lea.vmem [#allocation3], %s562
        %v564 = vld [vmem:[%s563] sm:$0xff]
        %v565 = vld [vmem:[%s563 + $0x8] sm:$0xff]
        %s566 = smul.u32 2, 2
        %s567 = smul.addr %s566, 8
        %s568 = scalar_lea.vmem [#allocation3], %s567
        %v569 = vld [vmem:[%s568] sm:$0xff]
        %v570 = vld [vmem:[%s568 + $0x8] sm:$0xff]
        %571 = vxpose.xlu0.b32.start [1/16] %v564, 128
        %572 = vxpose.xlu0.b32.cont [2/16] 0.0, 128
        %573 = vxpose.xlu0.b32.cont [3/16] 0.0, 128
        %574 = vxpose.xlu0.b32.cont [4/16] 0.0, 128
        %575 = vxpose.xlu0.b32.cont [5/16] 0.0, 128
        %576 = vxpose.xlu0.b32.cont [6/16] 0.0, 128
        %577 = vxpose.xlu0.b32.cont [7/16] 0.0, 128
        %578 = vxpose.xlu0.b32.cont [8/16] 0.0, 128
        %579 = vxpose.xlu0.b32.cont [9/16] 0.0, 128
        %580 = vxpose.xlu0.b32.cont [10/16] 0.0, 128
        %581 = vxpose.xlu0.b32.cont [11/16] 0.0, 128
        %582 = vxpose.xlu0.b32.cont [12/16] 0.0, 128
        %583 = vxpose.xlu0.b32.cont [13/16] 0.0, 128
        %584 = vxpose.xlu0.b32.cont [14/16] 0.0, 128
        %585 = vxpose.xlu0.b32.cont [15/16] 0.0, 128
        %586 = vxpose.xlu0.b32.end [16/16] 0.0, 128
        %v587 = vpop.trf.xlu0
        %v588 = vpop.trf.xlu0
        %v589 = vpop.trf.xlu0
        %v590 = vpop.trf.xlu0
        %v591 = vpop.trf.xlu0
        %v592 = vpop.trf.xlu0
        %v593 = vpop.trf.xlu0
        %v594 = vpop.trf.xlu0
        %v595 = vpop.trf.xlu0
        %v596 = vpop.trf.xlu0
        %v597 = vpop.trf.xlu0
        %v598 = vpop.trf.xlu0
        %v599 = vpop.trf.xlu0
        %v600 = vpop.trf.xlu0
        %v601 = vpop.trf.xlu0
        %v602 = vpop.trf.xlu0
        %603 = vxpose.xlu0.b32.start [1/16] %v565, 128
        %604 = vxpose.xlu0.b32.cont [2/16] 0.0, 128
        %605 = vxpose.xlu0.b32.cont [3/16] 0.0, 128
        %606 = vxpose.xlu0.b32.cont [4/16] 0.0, 128
        %607 = vxpose.xlu0.b32.cont [5/16] 0.0, 128
        %608 = vxpose.xlu0.b32.cont [6/16] 0.0, 128
        %609 = vxpose.xlu0.b32.cont [7/16] 0.0, 128
        %610 = vxpose.xlu0.b32.cont [8/16] 0.0, 128
        %611 = vxpose.xlu0.b32.cont [9/16] 0.0, 128
        %612 = vxpose.xlu0.b32.cont [10/16] 0.0, 128
        %613 = vxpose.xlu0.b32.cont [11/16] 0.0, 128
        %614 = vxpose.xlu0.b32.cont [12/16] 0.0, 128
        %615 = vxpose.xlu0.b32.cont [13/16] 0.0, 128
        %616 = vxpose.xlu0.b32.cont [14/16] 0.0, 128
        %617 = vxpose.xlu0.b32.cont [15/16] 0.0, 128
        %618 = vxpose.xlu0.b32.end [16/16] 0.0, 128
        %v619 = vpop.trf.xlu0
        %v620 = vpop.trf.xlu0
        %v621 = vpop.trf.xlu0
        %v622 = vpop.trf.xlu0
        %v623 = vpop.trf.xlu0
        %v624 = vpop.trf.xlu0
        %v625 = vpop.trf.xlu0
        %v626 = vpop.trf.xlu0
        %v627 = vpop.trf.xlu0
        %v628 = vpop.trf.xlu0
        %v629 = vpop.trf.xlu0
        %v630 = vpop.trf.xlu0
        %v631 = vpop.trf.xlu0
        %v632 = vpop.trf.xlu0
        %v633 = vpop.trf.xlu0
        %v634 = vpop.trf.xlu0
        %vm635 = vcmask 64512
        %v637 = vsel %vm635, %v587, 0
        %v640 = vsel %vm635, %v588, 0
        %v643 = vsel %vm635, %v589, 0
        %v646 = vsel %vm635, %v590, 0
        %v649 = vsel %vm635, %v591, 0
        %v652 = vsel %vm635, %v592, 0
        %v655 = vsel %vm635, %v593, 0
        %v658 = vsel %vm635, %v594, 0
        %v661 = vsel %vm635, %v595, 0
        %v664 = vsel %vm635, %v596, 0
        %v667 = vsel %vm635, %v597, 0
        %v670 = vsel %vm635, %v598, 0
        %v673 = vsel %vm635, %v599, 0
        %v676 = vsel %vm635, %v600, 0
        %v679 = vsel %vm635, %v601, 0
        %v682 = vsel %vm635, %v602, 0
        %v685 = vsel %vm635, %v619, 0
        %v688 = vsel %vm635, %v620, 0
        %v691 = vsel %vm635, %v621, 0
        %v694 = vsel %vm635, %v622, 0
        %v697 = vsel %vm635, %v623, 0
        %v700 = vsel %vm635, %v624, 0
        %v703 = vsel %vm635, %v625, 0
        %v706 = vsel %vm635, %v626, 0
        %v709 = vsel %vm635, %v627, 0
        %v712 = vsel %vm635, %v628, 0
        %v715 = vsel %vm635, %v629, 0
        %v718 = vsel %vm635, %v630, 0
        %v721 = vsel %vm635, %v631, 0
        %v724 = vsel %vm635, %v632, 0
        %v727 = vsel %vm635, %v633, 0
        %v730 = vsel %vm635, %v634, 0
        %732 = vmatprep.subr.mxu0 %v561
        %733 = vmatpush1.msra.mxu0 %v560
        %734 = vmatprep.subr.mxu0 0.0
        %735 = vmatpush1.msra.mxu0 0.0
        %736 = vmatprep.subr.mxu0 0.0
        %737 = vmatpush1.msra.mxu0 0.0
        %738 = vmatprep.subr.mxu0 0.0
        %739 = vmatpush1.msra.mxu0 0.0
        %740 = vmatprep.subr.mxu0 0.0
        %741 = vmatpush1.msra.mxu0 0.0
        %742 = vmatprep.subr.mxu0 0.0
        %743 = vmatpush1.msra.mxu0 0.0
        %744 = vmatprep.subr.mxu0 0.0
        %745 = vmatpush1.msra.mxu0 0.0
        %746 = vmatprep.subr.mxu0 0.0
        %747 = vmatpush1.msra.mxu0 0.0
        %748 = vmatprep.subr.mxu0 0.0
        %749 = vmatpush1.msra.mxu0 0.0
        %750 = vmatprep.subr.mxu0 0.0
        %751 = vmatpush1.msra.mxu0 0.0
        %752 = vmatprep.subr.mxu0 0.0
        %753 = vmatpush1.msra.mxu0 0.0
        %754 = vmatprep.subr.mxu0 0.0
        %755 = vmatpush1.msra.mxu0 0.0
        %756 = vmatprep.subr.mxu0 0.0
        %757 = vmatpush1.msra.mxu0 0.0
        %758 = vmatprep.subr.mxu0 0.0
        %759 = vmatpush1.msra.mxu0 0.0
        %760 = vmatprep.subr.mxu0 0.0
        %761 = vmatpush1.msra.mxu0 0.0
        %762 = vmatprep.subr.mxu0 0.0
        %763 = vmatpush1.msra.mxu0 0.0
        %764 = vmatprep.subr.mxu0 0.0
        %765 = vmatpush1.msra.mxu0 0.0
        %766 = vmatprep.subr.mxu0 0.0
        %767 = vmatpush1.msra.mxu0 0.0
        %768 = vmatprep.subr.mxu0 0.0
        %769 = vmatpush1.msra.mxu0 0.0
        %770 = vmatprep.subr.mxu0 0.0
        %771 = vmatpush1.msra.mxu0 0.0
        %772 = vmatprep.subr.mxu0 0.0
        %773 = vmatpush1.msra.mxu0 0.0
        %774 = vmatprep.subr.mxu0 0.0
        %775 = vmatpush1.msra.mxu0 0.0
        %776 = vmatprep.subr.mxu0 0.0
        %777 = vmatpush1.msra.mxu0 0.0
        %778 = vmatprep.subr.mxu0 0.0
        %779 = vmatpush1.msra.mxu0 0.0
        %780 = vmatprep.subr.mxu0 0.0
        %781 = vmatpush1.msra.mxu0 0.0
        %782 = vmatprep.subr.mxu0 0.0
        %783 = vmatpush1.msra.mxu0 0.0
        %784 = vmatprep.subr.mxu0 0.0
        %785 = vmatpush1.msra.mxu0 0.0
        %786 = vmatprep.subr.mxu0 0.0
        %787 = vmatpush1.msra.mxu0 0.0
        %788 = vmatprep.subr.mxu0 0.0
        %789 = vmatpush1.msra.mxu0 0.0
        %790 = vmatprep.subr.mxu0 0.0
        %791 = vmatpush1.msra.mxu0 0.0
        %792 = vmatprep.subr.mxu0 0.0
        %793 = vmatpush1.msra.mxu0 0.0
        %794 = vmatprep.subr.mxu0 0.0
        %795 = vmatpush1.msra.mxu0 0.0
        %796 = vmatprep.mubr.f32.mxu0 0.0
        %797 = vmatmul.mubr.f32.gmra.mrb[0].mxu0 %v637
        %v798 = vpop.f32.mrb[0].mxu0
        %v799 = vadd.f32 0.0, %v798
        %v800 = vpop.f32.mrb[0].mxu0
        %v801 = vadd.f32 0.0, %v800
        %802 = vmatprep.mubr.f32.mxu0 0.0
        %803 = vmatmul.mubr.f32.gmra.mrb[0].mxu0 %v640
        %v804 = vpop.f32.mrb[0].mxu0
        %v805 = vadd.f32 0.0, %v804
        %v806 = vpop.f32.mrb[0].mxu0
        %v807 = vadd.f32 0.0, %v806
        %808 = vmatprep.mubr.f32.mxu0 0.0
        %809 = vmatmul.mubr.f32.gmra.mrb[0].mxu0 %v643
        %v810 = vpop.f32.mrb[0].mxu0
        %v811 = vadd.f32 0.0, %v810
        %v812 = vpop.f32.mrb[0].mxu0
        %v813 = vadd.f32 0.0, %v812
        %814 = vmatprep.mubr.f32.mxu0 0.0
        %815 = vmatmul.mubr.f32.gmra.mrb[0].mxu0 %v646
        %v816 = vpop.f32.mrb[0].mxu0
        %v817 = vadd.f32 0.0, %v816
        %v818 = vpop.f32.mrb[0].mxu0
        %v819 = vadd.f32 0.0, %v818
        %820 = vmatprep.mubr.f32.mxu0 0.0
        %821 = vmatmul.mubr.f32.gmra.mrb[0].mxu0 %v649
        %v822 = vpop.f32.mrb[0].mxu0
        %v823 = vadd.f32 0.0, %v822
        %v824 = vpop.f32.mrb[0].mxu0
        %v825 = vadd.f32 0.0, %v824
        %826 = vmatprep.mubr.f32.mxu0 0.0
        %827 = vmatmul.mubr.f32.gmra.mrb[0].mxu0 %v652
        %v828 = vpop.f32.mrb[0].mxu0
        %v829 = vadd.f32 0.0, %v828
        %v830 = vpop.f32.mrb[0].mxu0
        %v831 = vadd.f32 0.0, %v830
        %832 = vmatprep.mubr.f32.mxu0 0.0
        %833 = vmatmul.mubr.f32.gmra.mrb[0].mxu0 %v655
        %v834 = vpop.f32.mrb[0].mxu0
        %v835 = vadd.f32 0.0, %v834
        %v836 = vpop.f32.mrb[0].mxu0
        %v837 = vadd.f32 0.0, %v836
        %838 = vmatprep.mubr.f32.mxu0 0.0
        %839 = vmatmul.mubr.f32.gmra.mrb[0].mxu0 %v658
        %v840 = vpop.f32.mrb[0].mxu0
        %v841 = vadd.f32 0.0, %v840
        %v842 = vpop.f32.mrb[0].mxu0
        %v843 = vadd.f32 0.0, %v842
        %844 = vmatprep.mubr.f32.mxu0 0.0
        %845 = vmatmul.mubr.f32.gmra.mrb[0].mxu0 %v661
        %v846 = vpop.f32.mrb[0].mxu0
        %v847 = vadd.f32 0.0, %v846
        %v848 = vpop.f32.mrb[0].mxu0
        %v849 = vadd.f32 0.0, %v848
        %850 = vmatprep.mubr.f32.mxu0 0.0
        %851 = vmatmul.mubr.f32.gmra.mrb[0].mxu0 %v664
        %v852 = vpop.f32.mrb[0].mxu0
        %v853 = vadd.f32 0.0, %v852
        %v854 = vpop.f32.mrb[0].mxu0
        %v855 = vadd.f32 0.0, %v854
        %856 = vmatprep.mubr.f32.mxu0 0.0
        %857 = vmatmul.mubr.f32.gmra.mrb[0].mxu0 %v667
        %v858 = vpop.f32.mrb[0].mxu0
        %v859 = vadd.f32 0.0, %v858
        %v860 = vpop.f32.mrb[0].mxu0
        %v861 = vadd.f32 0.0, %v860
        %862 = vmatprep.mubr.f32.mxu0 0.0
        %863 = vmatmul.mubr.f32.gmra.mrb[0].mxu0 %v670
        %v864 = vpop.f32.mrb[0].mxu0
        %v865 = vadd.f32 0.0, %v864
        %v866 = vpop.f32.mrb[0].mxu0
        %v867 = vadd.f32 0.0, %v866
        %868 = vmatprep.mubr.f32.mxu0 0.0
        %869 = vmatmul.mubr.f32.gmra.mrb[0].mxu0 %v673
        %v870 = vpop.f32.mrb[0].mxu0
        %v871 = vadd.f32 0.0, %v870
        %v872 = vpop.f32.mrb[0].mxu0
        %v873 = vadd.f32 0.0, %v872
        %874 = vmatprep.mubr.f32.mxu0 0.0
        %875 = vmatmul.mubr.f32.gmra.mrb[0].mxu0 %v676
        %v876 = vpop.f32.mrb[0].mxu0
        %v877 = vadd.f32 0.0, %v876
        %v878 = vpop.f32.mrb[0].mxu0
        %v879 = vadd.f32 0.0, %v878
        %880 = vmatprep.mubr.f32.mxu0 0.0
        %881 = vmatmul.mubr.f32.gmra.mrb[0].mxu0 %v679
        %v882 = vpop.f32.mrb[0].mxu0
        %v883 = vadd.f32 0.0, %v882
        %v884 = vpop.f32.mrb[0].mxu0
        %v885 = vadd.f32 0.0, %v884
        %886 = vmatprep.mubr.f32.mxu0 0.0
        %887 = vmatmul.mubr.f32.gmra.mrb[0].mxu0 %v682
        %v888 = vpop.f32.mrb[0].mxu0
        %v889 = vadd.f32 0.0, %v888
        %v890 = vpop.f32.mrb[0].mxu0
        %v891 = vadd.f32 0.0, %v890
        %892 = vmatprep.mubr.f32.mxu0 0.0
        %893 = vmatmul.mubr.f32.gmra.mrb[0].mxu0 %v685
        %v894 = vpop.f32.mrb[0].mxu0
        %v895 = vadd.f32 0.0, %v894
        %v896 = vpop.f32.mrb[0].mxu0
        %v897 = vadd.f32 0.0, %v896
        %898 = vmatprep.mubr.f32.mxu0 0.0
        %899 = vmatmul.mubr.f32.gmra.mrb[0].mxu0 %v688
        %v900 = vpop.f32.mrb[0].mxu0
        %v901 = vadd.f32 0.0, %v900
        %v902 = vpop.f32.mrb[0].mxu0
        %v903 = vadd.f32 0.0, %v902
        %904 = vmatprep.mubr.f32.mxu0 0.0
        %905 = vmatmul.mubr.f32.gmra.mrb[0].mxu0 %v691
        %v906 = vpop.f32.mrb[0].mxu0
        %v907 = vadd.f32 0.0, %v906
        %v908 = vpop.f32.mrb[0].mxu0
        %v909 = vadd.f32 0.0, %v908
        %910 = vmatprep.mubr.f32.mxu0 0.0
        %911 = vmatmul.mubr.f32.gmra.mrb[0].mxu0 %v694
        %v912 = vpop.f32.mrb[0].mxu0
        %v913 = vadd.f32 0.0, %v912
        %v914 = vpop.f32.mrb[0].mxu0
        %v915 = vadd.f32 0.0, %v914
        %916 = vmatprep.mubr.f32.mxu0 0.0
        %917 = vmatmul.mubr.f32.gmra.mrb[0].mxu0 %v697
        %v918 = vpop.f32.mrb[0].mxu0
        %v919 = vadd.f32 0.0, %v918
        %v920 = vpop.f32.mrb[0].mxu0
        %v921 = vadd.f32 0.0, %v920
        %922 = vmatprep.mubr.f32.mxu0 0.0
        %923 = vmatmul.mubr.f32.gmra.mrb[0].mxu0 %v700
        %v924 = vpop.f32.mrb[0].mxu0
        %v925 = vadd.f32 0.0, %v924
        %v926 = vpop.f32.mrb[0].mxu0
        %v927 = vadd.f32 0.0, %v926
        %928 = vmatprep.mubr.f32.mxu0 0.0
        %929 = vmatmul.mubr.f32.gmra.mrb[0].mxu0 %v703
        %v930 = vpop.f32.mrb[0].mxu0
        %v931 = vadd.f32 0.0, %v930
        %v932 = vpop.f32.mrb[0].mxu0
        %v933 = vadd.f32 0.0, %v932
        %934 = vmatprep.mubr.f32.mxu0 0.0
        %935 = vmatmul.mubr.f32.gmra.mrb[0].mxu0 %v706
        %v936 = vpop.f32.mrb[0].mxu0
        %v937 = vadd.f32 0.0, %v936
        %v938 = vpop.f32.mrb[0].mxu0
        %v939 = vadd.f32 0.0, %v938
        %940 = vmatprep.mubr.f32.mxu0 0.0
        %941 = vmatmul.mubr.f32.gmra.mrb[0].mxu0 %v709
        %v942 = vpop.f32.mrb[0].mxu0
        %v943 = vadd.f32 0.0, %v942
        %v944 = vpop.f32.mrb[0].mxu0
        %v945 = vadd.f32 0.0, %v944
        %946 = vmatprep.mubr.f32.mxu0 0.0
        %947 = vmatmul.mubr.f32.gmra.mrb[0].mxu0 %v712
        %v948 = vpop.f32.mrb[0].mxu0
        %v949 = vadd.f32 0.0, %v948
        %v950 = vpop.f32.mrb[0].mxu0
        %v951 = vadd.f32 0.0, %v950
        %952 = vmatprep.mubr.f32.mxu0 0.0
        %953 = vmatmul.mubr.f32.gmra.mrb[0].mxu0 %v715
        %v954 = vpop.f32.mrb[0].mxu0
        %v955 = vadd.f32 0.0, %v954
        %v956 = vpop.f32.mrb[0].mxu0
        %v957 = vadd.f32 0.0, %v956
        %958 = vmatprep.mubr.f32.mxu0 0.0
        %959 = vmatmul.mubr.f32.gmra.mrb[0].mxu0 %v718
        %v960 = vpop.f32.mrb[0].mxu0
        %v961 = vadd.f32 0.0, %v960
        %v962 = vpop.f32.mrb[0].mxu0
        %v963 = vadd.f32 0.0, %v962
        %964 = vmatprep.mubr.f32.mxu0 0.0
        %965 = vmatmul.mubr.f32.gmra.mrb[0].mxu0 %v721
        %v966 = vpop.f32.mrb[0].mxu0
        %v967 = vadd.f32 0.0, %v966
        %v968 = vpop.f32.mrb[0].mxu0
        %v969 = vadd.f32 0.0, %v968
        %970 = vmatprep.mubr.f32.mxu0 0.0
        %971 = vmatmul.mubr.f32.gmra.mrb[0].mxu0 %v724
        %v972 = vpop.f32.mrb[0].mxu0
        %v973 = vadd.f32 0.0, %v972
        %v974 = vpop.f32.mrb[0].mxu0
        %v975 = vadd.f32 0.0, %v974
        %976 = vmatprep.mubr.f32.mxu0 0.0
        %977 = vmatmul.mubr.f32.gmra.mrb[0].mxu0 %v727
        %v978 = vpop.f32.mrb[0].mxu0
        %v979 = vadd.f32 0.0, %v978
        %v980 = vpop.f32.mrb[0].mxu0
        %v981 = vadd.f32 0.0, %v980
        %982 = vmatprep.mubr.f32.mxu0 0.0
        %983 = vmatmul.mubr.f32.gmra.mrb[0].mxu0 %v730
        %v984 = vpop.f32.mrb[0].mxu0
        %v985 = vadd.f32 0.0, %v984
        %v986 = vpop.f32.mrb[0].mxu0
        %v987 = vadd.f32 0.0, %v986
        %988 = vdwg.mxu0
        %v989 = vmax.f32 %v799, %v811
        %v990 = vmax.f32 %v805, %v817
        %v991 = vmax.f32 %v989, %v823
        %v992 = vmax.f32 %v990, %v829
        %v993 = vmax.f32 %v991, %v835
        %v994 = vmax.f32 %v992, %v841
        %v995 = vmax.f32 %v993, %v847
        %v996 = vmax.f32 %v994, %v853
        %v997 = vmax.f32 %v995, %v859
        %v998 = vmax.f32 %v996, %v865
        %v999 = vmax.f32 %v997, %v871
        %v1000 = vmax.f32 %v998, %v877
        %v1001 = vmax.f32 %v999, %v883
        %v1002 = vmax.f32 %v1000, %v889
        %v1003 = vmax.f32 %v1001, %v895
        %v1004 = vmax.f32 %v1002, %v901
        %v1005 = vmax.f32 %v1003, %v907
        %v1006 = vmax.f32 %v1004, %v913
        %v1007 = vmax.f32 %v1005, %v919
        %v1008 = vmax.f32 %v1006, %v925
        %v1009 = vmax.f32 %v1007, %v931
        %v1010 = vmax.f32 %v1008, %v937
        %v1011 = vmax.f32 %v1009, %v943
        %v1012 = vmax.f32 %v1010, %v949
        %v1013 = vmax.f32 %v1011, %v955
        %v1014 = vmax.f32 %v1012, %v961
        %v1015 = vmax.f32 %v1013, %v967
        %v1016 = vmax.f32 %v1014, %v973
        %v1017 = vmax.f32 %v1015, %v979
        %v1018 = vmax.f32 %v1016, %v985
        %v1019 = vmax.f32 %v1017, %v1018
        %v1020 = vrot.slane %v1019, 4
        %v1021 = vmax.f32 %v1019, %v1020
        %v1022 = vrot.slane %v1021, 2
        %v1023 = vmax.f32 %v1021, %v1022
        %v1024 = vrot.slane %v1023, 1
        %v1025 = vmax.f32 %v1023, %v1024
        %v1026 = vmax.f32 %v801, %v813
        %v1027 = vmax.f32 %v807, %v819
        %v1028 = vmax.f32 %v1026, %v825
        %v1029 = vmax.f32 %v1027, %v831
        %v1030 = vmax.f32 %v1028, %v837
        %v1031 = vmax.f32 %v1029, %v843
        %v1032 = vmax.f32 %v1030, %v849
        %v1033 = vmax.f32 %v1031, %v855
        %v1034 = vmax.f32 %v1032, %v861
        %v1035 = vmax.f32 %v1033, %v867
        %v1036 = vmax.f32 %v1034, %v873
        %v1037 = vmax.f32 %v1035, %v879
        %v1038 = vmax.f32 %v1036, %v885
        %v1039 = vmax.f32 %v1037, %v891
        %v1040 = vmax.f32 %v1038, %v897
        %v1041 = vmax.f32 %v1039, %v903
        %v1042 = vmax.f32 %v1040, %v909
        %v1043 = vmax.f32 %v1041, %v915
        %v1044 = vmax.f32 %v1042, %v921
        %v1045 = vmax.f32 %v1043, %v927
        %v1046 = vmax.f32 %v1044, %v933
        %v1047 = vmax.f32 %v1045, %v939
        %v1048 = vmax.f32 %v1046, %v945
        %v1049 = vmax.f32 %v1047, %v951
        %v1050 = vmax.f32 %v1048, %v957
        %v1051 = vmax.f32 %v1049, %v963
        %v1052 = vmax.f32 %v1050, %v969
        %v1053 = vmax.f32 %v1051, %v975
        %v1054 = vmax.f32 %v1052, %v981
        %v1055 = vmax.f32 %v1053, %v987
        %v1056 = vmax.f32 %v1054, %v1055
        %v1057 = vrot.slane %v1056, 4
        %v1058 = vmax.f32 %v1056, %v1057
        %v1059 = vrot.slane %v1058, 2
        %v1060 = vmax.f32 %v1058, %v1059
        %v1061 = vrot.slane %v1060, 1
        %v1062 = vmax.f32 %v1060, %v1061
        %v1063 = vsub.f32 %v799, %v1025
        %v1064 = vsub.f32 %v801, %v1062
        %v1065 = vsub.f32 %v805, %v1025
        %v1066 = vsub.f32 %v807, %v1062
        %v1067 = vsub.f32 %v811, %v1025
        %v1068 = vsub.f32 %v813, %v1062
        %v1069 = vsub.f32 %v817, %v1025
        %v1070 = vsub.f32 %v819, %v1062
        %v1071 = vsub.f32 %v823, %v1025
        %v1072 = vsub.f32 %v825, %v1062
        %v1073 = vsub.f32 %v829, %v1025
        %v1074 = vsub.f32 %v831, %v1062
        %v1075 = vsub.f32 %v835, %v1025
        %v1076 = vsub.f32 %v837, %v1062
        %v1077 = vsub.f32 %v841, %v1025
        %v1078 = vsub.f32 %v843, %v1062
        %v1079 = vsub.f32 %v847, %v1025
        %v1080 = vsub.f32 %v849, %v1062
        %v1081 = vsub.f32 %v853, %v1025
        %v1082 = vsub.f32 %v855, %v1062
        %v1083 = vsub.f32 %v859, %v1025
        %v1084 = vsub.f32 %v861, %v1062
        %v1085 = vsub.f32 %v865, %v1025
        %v1086 = vsub.f32 %v867, %v1062
        %v1087 = vsub.f32 %v871, %v1025
        %v1088 = vsub.f32 %v873, %v1062
        %v1089 = vsub.f32 %v877, %v1025
        %v1090 = vsub.f32 %v879, %v1062
        %v1091 = vsub.f32 %v883, %v1025
        %v1092 = vsub.f32 %v885, %v1062
        %v1093 = vsub.f32 %v889, %v1025
        %v1094 = vsub.f32 %v891, %v1062
        %v1095 = vsub.f32 %v895, %v1025
        %v1096 = vsub.f32 %v897, %v1062
        %v1097 = vsub.f32 %v901, %v1025
        %v1098 = vsub.f32 %v903, %v1062
        %v1099 = vsub.f32 %v907, %v1025
        %v1100 = vsub.f32 %v909, %v1062
        %v1101 = vsub.f32 %v913, %v1025
        %v1102 = vsub.f32 %v915, %v1062
        %v1103 = vsub.f32 %v919, %v1025
        %v1104 = vsub.f32 %v921, %v1062
        %v1105 = vsub.f32 %v925, %v1025
        %v1106 = vsub.f32 %v927, %v1062
        %v1107 = vsub.f32 %v931, %v1025
        %v1108 = vsub.f32 %v933, %v1062
        %v1109 = vsub.f32 %v937, %v1025
        %v1110 = vsub.f32 %v939, %v1062
        %v1111 = vsub.f32 %v943, %v1025
        %v1112 = vsub.f32 %v945, %v1062
        %v1113 = vsub.f32 %v949, %v1025
        %v1114 = vsub.f32 %v951, %v1062
        %v1115 = vsub.f32 %v955, %v1025
        %v1116 = vsub.f32 %v957, %v1062
        %v1117 = vsub.f32 %v961, %v1025
        %v1118 = vsub.f32 %v963, %v1062
        %v1119 = vsub.f32 %v967, %v1025
        %v1120 = vsub.f32 %v969, %v1062
        %v1121 = vsub.f32 %v973, %v1025
        %v1122 = vsub.f32 %v975, %v1062
        %v1123 = vsub.f32 %v979, %v1025
        %v1124 = vsub.f32 %v981, %v1062
        %v1125 = vsub.f32 %v985, %v1025
        %v1126 = vsub.f32 %v987, %v1062
        %v1127 = vmul.f32 %v1063, 1.442695
        %v1128 = vpow.pop %v1127
        %v1129 = vmul.f32 %v1064, 1.442695
        %v1130 = vpow.pop %v1129
        %v1131 = vmul.f32 %v1065, 1.442695
        %v1132 = vpow.pop %v1131
        %v1133 = vmul.f32 %v1066, 1.442695
        %v1134 = vpow.pop %v1133
        %v1135 = vmul.f32 %v1067, 1.442695
        %v1136 = vpow.pop %v1135
        %v1137 = vmul.f32 %v1068, 1.442695
        %v1138 = vpow.pop %v1137
        %v1139 = vmul.f32 %v1069, 1.442695
        %v1140 = vpow.pop %v1139
        %v1141 = vmul.f32 %v1070, 1.442695
        %v1142 = vpow.pop %v1141
        %v1143 = vmul.f32 %v1071, 1.442695
        %v1144 = vpow.pop %v1143
        %v1145 = vmul.f32 %v1072, 1.442695
        %v1146 = vpow.pop %v1145
        %v1147 = vmul.f32 %v1073, 1.442695
        %v1148 = vpow.pop %v1147
        %v1149 = vmul.f32 %v1074, 1.442695
        %v1150 = vpow.pop %v1149
        %v1151 = vmul.f32 %v1075, 1.442695
        %v1152 = vpow.pop %v1151
        %v1153 = vmul.f32 %v1076, 1.442695
        %v1154 = vpow.pop %v1153
        %v1155 = vmul.f32 %v1077, 1.442695
        %v1156 = vpow.pop %v1155
        %v1157 = vmul.f32 %v1078, 1.442695
        %v1158 = vpow.pop %v1157
        %v1159 = vmul.f32 %v1079, 1.442695
        %v1160 = vpow.pop %v1159
        %v1161 = vmul.f32 %v1080, 1.442695
        %v1162 = vpow.pop %v1161
        %v1163 = vmul.f32 %v1081, 1.442695
        %v1164 = vpow.pop %v1163
        %v1165 = vmul.f32 %v1082, 1.442695
        %v1166 = vpow.pop %v1165
        %v1167 = vmul.f32 %v1083, 1.442695
        %v1168 = vpow.pop %v1167
        %v1169 = vmul.f32 %v1084, 1.442695
        %v1170 = vpow.pop %v1169
        %v1171 = vmul.f32 %v1085, 1.442695
        %v1172 = vpow.pop %v1171
        %v1173 = vmul.f32 %v1086, 1.442695
        %v1174 = vpow.pop %v1173
        %v1175 = vmul.f32 %v1087, 1.442695
        %v1176 = vpow.pop %v1175
        %v1177 = vmul.f32 %v1088, 1.442695
        %v1178 = vpow.pop %v1177
        %v1179 = vmul.f32 %v1089, 1.442695
        %v1180 = vpow.pop %v1179
        %v1181 = vmul.f32 %v1090, 1.442695
        %v1182 = vpow.pop %v1181
        %v1183 = vmul.f32 %v1091, 1.442695
        %v1184 = vpow.pop %v1183
        %v1185 = vmul.f32 %v1092, 1.442695
        %v1186 = vpow.pop %v1185
        %v1187 = vmul.f32 %v1093, 1.442695
        %v1188 = vpow.pop %v1187
        %v1189 = vmul.f32 %v1094, 1.442695
        %v1190 = vpow.pop %v1189
        %v1191 = vmul.f32 %v1095, 1.442695
        %v1192 = vpow.pop %v1191
        %v1193 = vmul.f32 %v1096, 1.442695
        %v1194 = vpow.pop %v1193
        %v1195 = vmul.f32 %v1097, 1.442695
        %v1196 = vpow.pop %v1195
        %v1197 = vmul.f32 %v1098, 1.442695
        %v1198 = vpow.pop %v1197
        %v1199 = vmul.f32 %v1099, 1.442695
        %v1200 = vpow.pop %v1199
        %v1201 = vmul.f32 %v1100, 1.442695
        %v1202 = vpow.pop %v1201
        %v1203 = vmul.f32 %v1101, 1.442695
        %v1204 = vpow.pop %v1203
        %v1205 = vmul.f32 %v1102, 1.442695
        %v1206 = vpow.pop %v1205
        %v1207 = vmul.f32 %v1103, 1.442695
        %v1208 = vpow.pop %v1207
        %v1209 = vmul.f32 %v1104, 1.442695
        %v1210 = vpow.pop %v1209
        %v1211 = vmul.f32 %v1105, 1.442695
        %v1212 = vpow.pop %v1211
        %v1213 = vmul.f32 %v1106, 1.442695
        %v1214 = vpow.pop %v1213
        %v1215 = vmul.f32 %v1107, 1.442695
        %v1216 = vpow.pop %v1215
        %v1217 = vmul.f32 %v1108, 1.442695
        %v1218 = vpow.pop %v1217
        %v1219 = vmul.f32 %v1109, 1.442695
        %v1220 = vpow.pop %v1219
        %v1221 = vmul.f32 %v1110, 1.442695
        %v1222 = vpow.pop %v1221
        %v1223 = vmul.f32 %v1111, 1.442695
        %v1224 = vpow.pop %v1223
        %v1225 = vmul.f32 %v1112, 1.442695
        %v1226 = vpow.pop %v1225
        %v1227 = vmul.f32 %v1113, 1.442695
        %v1228 = vpow.pop %v1227
        %v1229 = vmul.f32 %v1114, 1.442695
        %v1230 = vpow.pop %v1229
        %v1231 = vmul.f32 %v1115, 1.442695
        %v1232 = vpow.pop %v1231
        %v1233 = vmul.f32 %v1116, 1.442695
        %v1234 = vpow.pop %v1233
        %v1235 = vmul.f32 %v1117, 1.442695
        %v1236 = vpow.pop %v1235
        %v1237 = vmul.f32 %v1118, 1.442695
        %v1238 = vpow.pop %v1237
        %v1239 = vmul.f32 %v1119, 1.442695
        %v1240 = vpow.pop %v1239
        %v1241 = vmul.f32 %v1120, 1.442695
        %v1242 = vpow.pop %v1241
        %v1243 = vmul.f32 %v1121, 1.442695
        %v1244 = vpow.pop %v1243
        %v1245 = vmul.f32 %v1122, 1.442695
        %v1246 = vpow.pop %v1245
        %v1247 = vmul.f32 %v1123, 1.442695
        %v1248 = vpow.pop %v1247
        %v1249 = vmul.f32 %v1124, 1.442695
        %v1250 = vpow.pop %v1249
        %v1251 = vmul.f32 %v1125, 1.442695
        %v1252 = vpow.pop %v1251
        %v1253 = vmul.f32 %v1126, 1.442695
        %v1254 = vpow.pop %v1253
        %v1255 = vadd.f32 %v1128, %v1132
        %v1256 = vadd.f32 %v1255, %v1136
        %v1257 = vadd.f32 %v1256, %v1140
        %v1258 = vadd.f32 %v1257, %v1144
        %v1259 = vadd.f32 %v1258, %v1148
        %v1260 = vadd.f32 %v1259, %v1152
        %v1261 = vadd.f32 %v1260, %v1156
        %v1262 = vadd.f32 %v1261, %v1160
        %v1263 = vadd.f32 %v1262, %v1164
        %v1264 = vadd.f32 %v1263, %v1168
        %v1265 = vadd.f32 %v1264, %v1172
        %v1266 = vadd.f32 %v1265, %v1176
        %v1267 = vadd.f32 %v1266, %v1180
        %v1268 = vadd.f32 %v1267, %v1184
        %v1269 = vadd.f32 %v1268, %v1188
        %v1270 = vadd.f32 %v1269, %v1192
        %v1271 = vadd.f32 %v1270, %v1196
        %v1272 = vadd.f32 %v1271, %v1200
        %v1273 = vadd.f32 %v1272, %v1204
        %v1274 = vadd.f32 %v1273, %v1208
        %v1275 = vadd.f32 %v1274, %v1212
        %v1276 = vadd.f32 %v1275, %v1216
        %v1277 = vadd.f32 %v1276, %v1220
        %v1278 = vadd.f32 %v1277, %v1224
        %v1279 = vadd.f32 %v1278, %v1228
        %v1280 = vadd.f32 %v1279, %v1232
        %v1281 = vadd.f32 %v1280, %v1236
        %v1282 = vadd.f32 %v1281, %v1240
        %v1283 = vadd.f32 %v1282, %v1244
        %v1284 = vadd.f32 %v1283, %v1248
        %v1285 = vadd.f32 %v1284, %v1252
        %v1286 = vrot.slane %v1285, 4
        %v1287 = vadd.f32 %v1285, %v1286
        %v1288 = vrot.slane %v1287, 2
        %v1289 = vadd.f32 %v1287, %v1288
        %v1290 = vrot.slane %v1289, 1
        %v1291 = vadd.f32 %v1289, %v1290
        %v1292 = vadd.f32 %v1130, %v1134
        %v1293 = vadd.f32 %v1292, %v1138
        %v1294 = vadd.f32 %v1293, %v1142
        %v1295 = vadd.f32 %v1294, %v1146
        %v1296 = vadd.f32 %v1295, %v1150
        %v1297 = vadd.f32 %v1296, %v1154
        %v1298 = vadd.f32 %v1297, %v1158
        %v1299 = vadd.f32 %v1298, %v1162
        %v1300 = vadd.f32 %v1299, %v1166
        %v1301 = vadd.f32 %v1300, %v1170
        %v1302 = vadd.f32 %v1301, %v1174
        %v1303 = vadd.f32 %v1302, %v1178
        %v1304 = vadd.f32 %v1303, %v1182
        %v1305 = vadd.f32 %v1304, %v1186
        %v1306 = vadd.f32 %v1305, %v1190
        %v1307 = vadd.f32 %v1306, %v1194
        %v1308 = vadd.f32 %v1307, %v1198
        %v1309 = vadd.f32 %v1308, %v1202
        %v1310 = vadd.f32 %v1309, %v1206
        %v1311 = vadd.f32 %v1310, %v1210
        %v1312 = vadd.f32 %v1311, %v1214
        %v1313 = vadd.f32 %v1312, %v1218
        %v1314 = vadd.f32 %v1313, %v1222
        %v1315 = vadd.f32 %v1314, %v1226
        %v1316 = vadd.f32 %v1315, %v1230
        %v1317 = vadd.f32 %v1316, %v1234
        %v1318 = vadd.f32 %v1317, %v1238
        %v1319 = vadd.f32 %v1318, %v1242
        %v1320 = vadd.f32 %v1319, %v1246
        %v1321 = vadd.f32 %v1320, %v1250
        %v1322 = vadd.f32 %v1321, %v1254
        %v1323 = vrot.slane %v1322, 4
        %v1324 = vadd.f32 %v1322, %v1323
        %v1325 = vrot.slane %v1324, 2
        %v1326 = vadd.f32 %v1324, %v1325
        %v1327 = vrot.slane %v1326, 1
        %v1328 = vadd.f32 %v1326, %v1327
        %1329 = vmatprep.subr.mxu0 %v1130
        %1330 = vmatpush1.msra.mxu0 %v1128
        %1331 = vmatprep.subr.mxu0 %v1134
        %1332 = vmatpush1.msra.mxu0 %v1132
        %1333 = vmatprep.subr.mxu0 %v1138
        %1334 = vmatpush1.msra.mxu0 %v1136
        %1335 = vmatprep.subr.mxu0 %v1142
        %1336 = vmatpush1.msra.mxu0 %v1140
        %1337 = vmatprep.subr.mxu0 %v1146
        %1338 = vmatpush1.msra.mxu0 %v1144
        %1339 = vmatprep.subr.mxu0 %v1150
        %1340 = vmatpush1.msra.mxu0 %v1148
        %1341 = vmatprep.subr.mxu0 %v1154
        %1342 = vmatpush1.msra.mxu0 %v1152
        %1343 = vmatprep.subr.mxu0 %v1158
        %1344 = vmatpush1.msra.mxu0 %v1156
        %1345 = vmatprep.subr.mxu0 %v1162
        %1346 = vmatpush1.msra.mxu0 %v1160
        %1347 = vmatprep.subr.mxu0 %v1166
        %1348 = vmatpush1.msra.mxu0 %v1164
        %1349 = vmatprep.subr.mxu0 %v1170
        %1350 = vmatpush1.msra.mxu0 %v1168
        %1351 = vmatprep.subr.mxu0 %v1174
        %1352 = vmatpush1.msra.mxu0 %v1172
        %1353 = vmatprep.subr.mxu0 %v1178
        %1354 = vmatpush1.msra.mxu0 %v1176
        %1355 = vmatprep.subr.mxu0 %v1182
        %1356 = vmatpush1.msra.mxu0 %v1180
        %1357 = vmatprep.subr.mxu0 %v1186
        %1358 = vmatpush1.msra.mxu0 %v1184
        %1359 = vmatprep.subr.mxu0 %v1190
        %1360 = vmatpush1.msra.mxu0 %v1188
        %1361 = vmatprep.subr.mxu0 %v1194
        %1362 = vmatpush1.msra.mxu0 %v1192
        %1363 = vmatprep.subr.mxu0 %v1198
        %1364 = vmatpush1.msra.mxu0 %v1196
        %1365 = vmatprep.subr.mxu0 %v1202
        %1366 = vmatpush1.msra.mxu0 %v1200
        %1367 = vmatprep.subr.mxu0 %v1206
        %1368 = vmatpush1.msra.mxu0 %v1204
        %1369 = vmatprep.subr.mxu0 %v1210
        %1370 = vmatpush1.msra.mxu0 %v1208
        %1371 = vmatprep.subr.mxu0 %v1214
        %1372 = vmatpush1.msra.mxu0 %v1212
        %1373 = vmatprep.subr.mxu0 %v1218
        %1374 = vmatpush1.msra.mxu0 %v1216
        %1375 = vmatprep.subr.mxu0 %v1222
        %1376 = vmatpush1.msra.mxu0 %v1220
        %1377 = vmatprep.subr.mxu0 %v1226
        %1378 = vmatpush1.msra.mxu0 %v1224
        %1379 = vmatprep.subr.mxu0 %v1230
        %1380 = vmatpush1.msra.mxu0 %v1228
        %1381 = vmatprep.subr.mxu0 %v1234
        %1382 = vmatpush1.msra.mxu0 %v1232
        %1383 = vmatprep.subr.mxu0 %v1238
        %1384 = vmatpush1.msra.mxu0 %v1236
        %1385 = vmatprep.subr.mxu0 %v1242
        %1386 = vmatpush1.msra.mxu0 %v1240
        %1387 = vmatprep.subr.mxu0 %v1246
        %1388 = vmatpush1.msra.mxu0 %v1244
        %1389 = vmatprep.subr.mxu0 %v1250
        %1390 = vmatpush1.msra.mxu0 %v1248
        %1391 = vmatprep.subr.mxu0 %v1254
        %1392 = vmatpush1.msra.mxu0 %v1252
        %1393 = vmatprep.mubr.f32.mxu0 %v570
        %1394 = vmatmul.mubr.f32.gmra.mrb[0].mxu0 %v569
        %v1395 = vpop.f32.mrb[0].mxu0
        %v1396 = vadd.f32 0.0, %v1395
        %v1397 = vpop.f32.mrb[0].mxu0
        %v1398 = vadd.f32 0.0, %v1397
        %1399 = vdwg.mxu0
        %v1400 = vrcp.pop %v1291
        %v1401 = vmul.f32 1.0, %v1400
        %v1402 = vrcp.pop %v1328
        %v1403 = vmul.f32 1.0, %v1402
        %v1404 = vmul.f32 %v1396, %v1401
        %v1405 = vmul.f32 %v1398, %v1403
        %s1406 = smul.addr %s557, 8
        %s1407 = scalar_lea.vmem [#allocation4], %s1406
        %1408 = vst [vmem:[%s1407] sm:$0xff] %v1404
        %1409 = vst [vmem:[%s1407 + $0x8] sm:$0xff] %v1405
        %s1410 = smul.u32 1, 2
        %s1411 = smul.addr %s1410, 8
        %s1412 = scalar_lea.vmem [#allocation2], %s1411
        %v1413 = vld [vmem:[%s1412] sm:$0xff]
        %v1414 = vld [vmem:[%s1412 + $0x8] sm:$0xff]
        %s1415 = smul.addr %s1410, 8
        %s1416 = scalar_lea.vmem [#allocation3], %s1415
        %v1417 = vld [vmem:[%s1416] sm:$0xff]
        %v1418 = vld [vmem:[%s1416 + $0x8] sm:$0xff]
        %s1419 = smul.u32 3, 2
        %s1420 = smul.addr %s1419, 8
        %s1421 = scalar_lea.vmem [#allocation3], %s1420
        %v1422 = vld [vmem:[%s1421] sm:$0xff]
        %v1423 = vld [vmem:[%s1421 + $0x8] sm:$0xff]
        %1424 = vxpose.xlu0.b32.start [1/16] %v1417, 128
        %1425 = vxpose.xlu0.b32.cont [2/16] 0.0, 128
        %1426 = vxpose.xlu0.b32.cont [3/16] 0.0, 128
        %1427 = vxpose.xlu0.b32.cont [4/16] 0.0, 128
        %1428 = vxpose.xlu0.b32.cont [5/16] 0.0, 128
        %1429 = vxpose.xlu0.b32.cont [6/16] 0.0, 128
        %1430 = vxpose.xlu0.b32.cont [7/16] 0.0, 128
        %1431 = vxpose.xlu0.b32.cont [8/16] 0.0, 128
        %1432 = vxpose.xlu0.b32.cont [9/16] 0.0, 128
        %1433 = vxpose.xlu0.b32.cont [10/16] 0.0, 128
        %1434 = vxpose.xlu0.b32.cont [11/16] 0.0, 128
        %1435 = vxpose.xlu0.b32.cont [12/16] 0.0, 128
        %1436 = vxpose.xlu0.b32.cont [13/16] 0.0, 128
        %1437 = vxpose.xlu0.b32.cont [14/16] 0.0, 128
        %1438 = vxpose.xlu0.b32.cont [15/16] 0.0, 128
        %1439 = vxpose.xlu0.b32.end [16/16] 0.0, 128
        %v1440 = vpop.trf.xlu0
        %v1441 = vpop.trf.xlu0
        %v1442 = vpop.trf.xlu0
        %v1443 = vpop.trf.xlu0
        %v1444 = vpop.trf.xlu0
        %v1445 = vpop.trf.xlu0
        %v1446 = vpop.trf.xlu0
        %v1447 = vpop.trf.xlu0
        %v1448 = vpop.trf.xlu0
        %v1449 = vpop.trf.xlu0
        %v1450 = vpop.trf.xlu0
        %v1451 = vpop.trf.xlu0
        %v1452 = vpop.trf.xlu0
        %v1453 = vpop.trf.xlu0
        %v1454 = vpop.trf.xlu0
        %v1455 = vpop.trf.xlu0
        %1456 = vxpose.xlu0.b32.start [1/16] %v1418, 128
        %1457 = vxpose.xlu0.b32.cont [2/16] 0.0, 128
        %1458 = vxpose.xlu0.b32.cont [3/16] 0.0, 128
        %1459 = vxpose.xlu0.b32.cont [4/16] 0.0, 128
        %1460 = vxpose.xlu0.b32.cont [5/16] 0.0, 128
        %1461 = vxpose.xlu0.b32.cont [6/16] 0.0, 128
        %1462 = vxpose.xlu0.b32.cont [7/16] 0.0, 128
        %1463 = vxpose.xlu0.b32.cont [8/16] 0.0, 128
        %1464 = vxpose.xlu0.b32.cont [9/16] 0.0, 128
        %1465 = vxpose.xlu0.b32.cont [10/16] 0.0, 128
        %1466 = vxpose.xlu0.b32.cont [11/16] 0.0, 128
        %1467 = vxpose.xlu0.b32.cont [12/16] 0.0, 128
        %1468 = vxpose.xlu0.b32.cont [13/16] 0.0, 128
        %1469 = vxpose.xlu0.b32.cont [14/16] 0.0, 128
        %1470 = vxpose.xlu0.b32.cont [15/16] 0.0, 128
        %1471 = vxpose.xlu0.b32.end [16/16] 0.0, 128
        %v1472 = vpop.trf.xlu0
        %v1473 = vpop.trf.xlu0
        %v1474 = vpop.trf.xlu0
        %v1475 = vpop.trf.xlu0
        %v1476 = vpop.trf.xlu0
        %v1477 = vpop.trf.xlu0
        %v1478 = vpop.trf.xlu0
        %v1479 = vpop.trf.xlu0
        %v1480 = vpop.trf.xlu0
        %v1481 = vpop.trf.xlu0
        %v1482 = vpop.trf.xlu0
        %v1483 = vpop.trf.xlu0
        %v1484 = vpop.trf.xlu0
        %v1485 = vpop.trf.xlu0
        %v1486 = vpop.trf.xlu0
        %v1487 = vpop.trf.xlu0
        %v1489 = vsel %vm635, %v1440, 0
        %v1492 = vsel %vm635, %v1441, 0
        %v1495 = vsel %vm635, %v1442, 0
        %v1498 = vsel %vm635, %v1443, 0
        %v1501 = vsel %vm635, %v1444, 0
        %v1504 = vsel %vm635, %v1445, 0
        %v1507 = vsel %vm635, %v1446, 0
        %v1510 = vsel %vm635, %v1447, 0
        %v1513 = vsel %vm635, %v1448, 0
        %v1516 = vsel %vm635, %v1449, 0
        %v1519 = vsel %vm635, %v1450, 0
        %v1522 = vsel %vm635, %v1451, 0
        %v1525 = vsel %vm635, %v1452, 0
        %v1528 = vsel %vm635, %v1453, 0
        %v1531 = vsel %vm635, %v1454, 0
        %v1534 = vsel %vm635, %v1455, 0
        %v1537 = vsel %vm635, %v1472, 0
        %v1540 = vsel %vm635, %v1473, 0
        %v1543 = vsel %vm635, %v1474, 0
        %v1546 = vsel %vm635, %v1475, 0
        %v1549 = vsel %vm635, %v1476, 0
        %v1552 = vsel %vm635, %v1477, 0
        %v1555 = vsel %vm635, %v1478, 0
        %v1558 = vsel %vm635, %v1479, 0
        %v1561 = vsel %vm635, %v1480, 0
        %v1564 = vsel %vm635, %v1481, 0
        %v1567 = vsel %vm635, %v1482, 0
        %v1570 = vsel %vm635, %v1483, 0
        %v1573 = vsel %vm635, %v1484, 0
        %v1576 = vsel %vm635, %v1485, 0
        %v1579 = vsel %vm635, %v1486, 0
        %v1582 = vsel %vm635, %v1487, 0
        %1584 = vmatprep.subr.mxu0 %v1414
        %1585 = vmatpush1.msra.mxu0 %v1413
        %1586 = vmatprep.subr.mxu0 0.0
        %1587 = vmatpush1.msra.mxu0 0.0
        %1588 = vmatprep.subr.mxu0 0.0
        %1589 = vmatpush1.msra.mxu0 0.0
        %1590 = vmatprep.subr.mxu0 0.0
        %1591 = vmatpush1.msra.mxu0 0.0
        %1592 = vmatprep.subr.mxu0 0.0
        %1593 = vmatpush1.msra.mxu0 0.0
        %1594 = vmatprep.subr.mxu0 0.0
        %1595 = vmatpush1.msra.mxu0 0.0
        %1596 = vmatprep.subr.mxu0 0.0
        %1597 = vmatpush1.msra.mxu0 0.0
        %1598 = vmatprep.subr.mxu0 0.0
        %1599 = vmatpush1.msra.mxu0 0.0
        %1600 = vmatprep.subr.mxu0 0.0
        %1601 = vmatpush1.msra.mxu0 0.0
        %1602 = vmatprep.subr.mxu0 0.0
        %1603 = vmatpush1.msra.mxu0 0.0
        %1604 = vmatprep.subr.mxu0 0.0
        %1605 = vmatpush1.msra.mxu0 0.0
        %1606 = vmatprep.subr.mxu0 0.0
        %1607 = vmatpush1.msra.mxu0 0.0
        %1608 = vmatprep.subr.mxu0 0.0
        %1609 = vmatpush1.msra.mxu0 0.0
        %1610 = vmatprep.subr.mxu0 0.0
        %1611 = vmatpush1.msra.mxu0 0.0
        %1612 = vmatprep.subr.mxu0 0.0
        %1613 = vmatpush1.msra.mxu0 0.0
        %1614 = vmatprep.subr.mxu0 0.0
        %1615 = vmatpush1.msra.mxu0 0.0
        %1616 = vmatprep.subr.mxu0 0.0
        %1617 = vmatpush1.msra.mxu0 0.0
        %1618 = vmatprep.subr.mxu0 0.0
        %1619 = vmatpush1.msra.mxu0 0.0
        %1620 = vmatprep.subr.mxu0 0.0
        %1621 = vmatpush1.msra.mxu0 0.0
        %1622 = vmatprep.subr.mxu0 0.0
        %1623 = vmatpush1.msra.mxu0 0.0
        %1624 = vmatprep.subr.mxu0 0.0
        %1625 = vmatpush1.msra.mxu0 0.0
        %1626 = vmatprep.subr.mxu0 0.0
        %1627 = vmatpush1.msra.mxu0 0.0
        %1628 = vmatprep.subr.mxu0 0.0
        %1629 = vmatpush1.msra.mxu0 0.0
        %1630 = vmatprep.subr.mxu0 0.0
        %1631 = vmatpush1.msra.mxu0 0.0
        %1632 = vmatprep.subr.mxu0 0.0
        %1633 = vmatpush1.msra.mxu0 0.0
        %1634 = vmatprep.subr.mxu0 0.0
        %1635 = vmatpush1.msra.mxu0 0.0
        %1636 = vmatprep.subr.mxu0 0.0
        %1637 = vmatpush1.msra.mxu0 0.0
        %1638 = vmatprep.subr.mxu0 0.0
        %1639 = vmatpush1.msra.mxu0 0.0
        %1640 = vmatprep.subr.mxu0 0.0
        %1641 = vmatpush1.msra.mxu0 0.0
        %1642 = vmatprep.subr.mxu0 0.0
        %1643 = vmatpush1.msra.mxu0 0.0
        %1644 = vmatprep.subr.mxu0 0.0
        %1645 = vmatpush1.msra.mxu0 0.0
        %1646 = vmatprep.subr.mxu0 0.0
        %1647 = vmatpush1.msra.mxu0 0.0
        %1648 = vmatprep.mubr.f32.mxu0 0.0
        %1649 = vmatmul.mubr.f32.gmra.mrb[0].mxu0 %v1489
        %v1650 = vpop.f32.mrb[0].mxu0
        %v1651 = vadd.f32 0.0, %v1650
        %v1652 = vpop.f32.mrb[0].mxu0
        %v1653 = vadd.f32 0.0, %v1652
        %1654 = vmatprep.mubr.f32.mxu0 0.0
        %1655 = vmatmul.mubr.f32.gmra.mrb[0].mxu0 %v1492
        %v1656 = vpop.f32.mrb[0].mxu0
        %v1657 = vadd.f32 0.0, %v1656
        %v1658 = vpop.f32.mrb[0].mxu0
        %v1659 = vadd.f32 0.0, %v1658
        %1660 = vmatprep.mubr.f32.mxu0 0.0
        %1661 = vmatmul.mubr.f32.gmra.mrb[0].mxu0 %v1495
        %v1662 = vpop.f32.mrb[0].mxu0
        %v1663 = vadd.f32 0.0, %v1662
        %v1664 = vpop.f32.mrb[0].mxu0
        %v1665 = vadd.f32 0.0, %v1664
        %1666 = vmatprep.mubr.f32.mxu0 0.0
        %1667 = vmatmul.mubr.f32.gmra.mrb[0].mxu0 %v1498
        %v1668 = vpop.f32.mrb[0].mxu0
        %v1669 = vadd.f32 0.0, %v1668
        %v1670 = vpop.f32.mrb[0].mxu0
        %v1671 = vadd.f32 0.0, %v1670
        %1672 = vmatprep.mubr.f32.mxu0 0.0
        %1673 = vmatmul.mubr.f32.gmra.mrb[0].mxu0 %v1501
        %v1674 = vpop.f32.mrb[0].mxu0
        %v1675 = vadd.f32 0.0, %v1674
        %v1676 = vpop.f32.mrb[0].mxu0
        %v1677 = vadd.f32 0.0, %v1676
        %1678 = vmatprep.mubr.f32.mxu0 0.0
        %1679 = vmatmul.mubr.f32.gmra.mrb[0].mxu0 %v1504
        %v1680 = vpop.f32.mrb[0].mxu0
        %v1681 = vadd.f32 0.0, %v1680
        %v1682 = vpop.f32.mrb[0].mxu0
        %v1683 = vadd.f32 0.0, %v1682
        %1684 = vmatprep.mubr.f32.mxu0 0.0
        %1685 = vmatmul.mubr.f32.gmra.mrb[0].mxu0 %v1507
        %v1686 = vpop.f32.mrb[0].mxu0
        %v1687 = vadd.f32 0.0, %v1686
        %v1688 = vpop.f32.mrb[0].mxu0
        %v1689 = vadd.f32 0.0, %v1688
        %1690 = vmatprep.mubr.f32.mxu0 0.0
        %1691 = vmatmul.mubr.f32.gmra.mrb[0].mxu0 %v1510
        %v1692 = vpop.f32.mrb[0].mxu0
        %v1693 = vadd.f32 0.0, %v1692
        %v1694 = vpop.f32.mrb[0].mxu0
        %v1695 = vadd.f32 0.0, %v1694
        %1696 = vmatprep.mubr.f32.mxu0 0.0
        %1697 = vmatmul.mubr.f32.gmra.mrb[0].mxu0 %v1513
        %v1698 = vpop.f32.mrb[0].mxu0
        %v1699 = vadd.f32 0.0, %v1698
        %v1700 = vpop.f32.mrb[0].mxu0
        %v1701 = vadd.f32 0.0, %v1700
        %1702 = vmatprep.mubr.f32.mxu0 0.0
        %1703 = vmatmul.mubr.f32.gmra.mrb[0].mxu0 %v1516
        %v1704 = vpop.f32.mrb[0].mxu0
        %v1705 = vadd.f32 0.0, %v1704
        %v1706 = vpop.f32.mrb[0].mxu0
        %v1707 = vadd.f32 0.0, %v1706
        %1708 = vmatprep.mubr.f32.mxu0 0.0
        %1709 = vmatmul.mubr.f32.gmra.mrb[0].mxu0 %v1519
        %v1710 = vpop.f32.mrb[0].mxu0
        %v1711 = vadd.f32 0.0, %v1710
        %v1712 = vpop.f32.mrb[0].mxu0
        %v1713 = vadd.f32 0.0, %v1712
        %1714 = vmatprep.mubr.f32.mxu0 0.0
        %1715 = vmatmul.mubr.f32.gmra.mrb[0].mxu0 %v1522
        %v1716 = vpop.f32.mrb[0].mxu0
        %v1717 = vadd.f32 0.0, %v1716
        %v1718 = vpop.f32.mrb[0].mxu0
        %v1719 = vadd.f32 0.0, %v1718
        %1720 = vmatprep.mubr.f32.mxu0 0.0
        %1721 = vmatmul.mubr.f32.gmra.mrb[0].mxu0 %v1525
        %v1722 = vpop.f32.mrb[0].mxu0
        %v1723 = vadd.f32 0.0, %v1722
        %v1724 = vpop.f32.mrb[0].mxu0
        %v1725 = vadd.f32 0.0, %v1724
        %1726 = vmatprep.mubr.f32.mxu0 0.0
        %1727 = vmatmul.mubr.f32.gmra.mrb[0].mxu0 %v1528
        %v1728 = vpop.f32.mrb[0].mxu0
        %v1729 = vadd.f32 0.0, %v1728
        %v1730 = vpop.f32.mrb[0].mxu0
        %v1731 = vadd.f32 0.0, %v1730
        %1732 = vmatprep.mubr.f32.mxu0 0.0
        %1733 = vmatmul.mubr.f32.gmra.mrb[0].mxu0 %v1531
        %v1734 = vpop.f32.mrb[0].mxu0
        %v1735 = vadd.f32 0.0, %v1734
        %v1736 = vpop.f32.mrb[0].mxu0
        %v1737 = vadd.f32 0.0, %v1736
        %1738 = vmatprep.mubr.f32.mxu0 0.0
        %1739 = vmatmul.mubr.f32.gmra.mrb[0].mxu0 %v1534
        %v1740 = vpop.f32.mrb[0].mxu0
        %v1741 = vadd.f32 0.0, %v1740
        %v1742 = vpop.f32.mrb[0].mxu0
        %v1743 = vadd.f32 0.0, %v1742
        %1744 = vmatprep.mubr.f32.mxu0 0.0
        %1745 = vmatmul.mubr.f32.gmra.mrb[0].mxu0 %v1537
        %v1746 = vpop.f32.mrb[0].mxu0
        %v1747 = vadd.f32 0.0, %v1746
        %v1748 = vpop.f32.mrb[0].mxu0
        %v1749 = vadd.f32 0.0, %v1748
        %1750 = vmatprep.mubr.f32.mxu0 0.0
        %1751 = vmatmul.mubr.f32.gmra.mrb[0].mxu0 %v1540
        %v1752 = vpop.f32.mrb[0].mxu0
        %v1753 = vadd.f32 0.0, %v1752
        %v1754 = vpop.f32.mrb[0].mxu0
        %v1755 = vadd.f32 0.0, %v1754
        %1756 = vmatprep.mubr.f32.mxu0 0.0
        %1757 = vmatmul.mubr.f32.gmra.mrb[0].mxu0 %v1543
        %v1758 = vpop.f32.mrb[0].mxu0
        %v1759 = vadd.f32 0.0, %v1758
        %v1760 = vpop.f32.mrb[0].mxu0
        %v1761 = vadd.f32 0.0, %v1760
        %1762 = vmatprep.mubr.f32.mxu0 0.0
        %1763 = vmatmul.mubr.f32.gmra.mrb[0].mxu0 %v1546
        %v1764 = vpop.f32.mrb[0].mxu0
        %v1765 = vadd.f32 0.0, %v1764
        %v1766 = vpop.f32.mrb[0].mxu0
        %v1767 = vadd.f32 0.0, %v1766
        %1768 = vmatprep.mubr.f32.mxu0 0.0
        %1769 = vmatmul.mubr.f32.gmra.mrb[0].mxu0 %v1549
        %v1770 = vpop.f32.mrb[0].mxu0
        %v1771 = vadd.f32 0.0, %v1770
        %v1772 = vpop.f32.mrb[0].mxu0
        %v1773 = vadd.f32 0.0, %v1772
        %1774 = vmatprep.mubr.f32.mxu0 0.0
        %1775 = vmatmul.mubr.f32.gmra.mrb[0].mxu0 %v1552
        %v1776 = vpop.f32.mrb[0].mxu0
        %v1777 = vadd.f32 0.0, %v1776
        %v1778 = vpop.f32.mrb[0].mxu0
        %v1779 = vadd.f32 0.0, %v1778
        %1780 = vmatprep.mubr.f32.mxu0 0.0
        %1781 = vmatmul.mubr.f32.gmra.mrb[0].mxu0 %v1555
        %v1782 = vpop.f32.mrb[0].mxu0
        %v1783 = vadd.f32 0.0, %v1782
        %v1784 = vpop.f32.mrb[0].mxu0
        %v1785 = vadd.f32 0.0, %v1784
        %1786 = vmatprep.mubr.f32.mxu0 0.0
        %1787 = vmatmul.mubr.f32.gmra.mrb[0].mxu0 %v1558
        %v1788 = vpop.f32.mrb[0].mxu0
        %v1789 = vadd.f32 0.0, %v1788
        %v1790 = vpop.f32.mrb[0].mxu0
        %v1791 = vadd.f32 0.0, %v1790
        %1792 = vmatprep.mubr.f32.mxu0 0.0
        %1793 = vmatmul.mubr.f32.gmra.mrb[0].mxu0 %v1561
        %v1794 = vpop.f32.mrb[0].mxu0
        %v1795 = vadd.f32 0.0, %v1794
        %v1796 = vpop.f32.mrb[0].mxu0
        %v1797 = vadd.f32 0.0, %v1796
        %1798 = vmatprep.mubr.f32.mxu0 0.0
        %1799 = vmatmul.mubr.f32.gmra.mrb[0].mxu0 %v1564
        %v1800 = vpop.f32.mrb[0].mxu0
        %v1801 = vadd.f32 0.0, %v1800
        %v1802 = vpop.f32.mrb[0].mxu0
        %v1803 = vadd.f32 0.0, %v1802
        %1804 = vmatprep.mubr.f32.mxu0 0.0
        %1805 = vmatmul.mubr.f32.gmra.mrb[0].mxu0 %v1567
        %v1806 = vpop.f32.mrb[0].mxu0
        %v1807 = vadd.f32 0.0, %v1806
        %v1808 = vpop.f32.mrb[0].mxu0
        %v1809 = vadd.f32 0.0, %v1808
        %1810 = vmatprep.mubr.f32.mxu0 0.0
        %1811 = vmatmul.mubr.f32.gmra.mrb[0].mxu0 %v1570
        %v1812 = vpop.f32.mrb[0].mxu0
        %v1813 = vadd.f32 0.0, %v1812
        %v1814 = vpop.f32.mrb[0].mxu0
        %v1815 = vadd.f32 0.0, %v1814
        %1816 = vmatprep.mubr.f32.mxu0 0.0
        %1817 = vmatmul.mubr.f32.gmra.mrb[0].mxu0 %v1573
        %v1818 = vpop.f32.mrb[0].mxu0
        %v1819 = vadd.f32 0.0, %v1818
        %v1820 = vpop.f32.mrb[0].mxu0
        %v1821 = vadd.f32 0.0, %v1820
        %1822 = vmatprep.mubr.f32.mxu0 0.0
        %1823 = vmatmul.mubr.f32.gmra.mrb[0].mxu0 %v1576
        %v1824 = vpop.f32.mrb[0].mxu0
        %v1825 = vadd.f32 0.0, %v1824
        %v1826 = vpop.f32.mrb[0].mxu0
        %v1827 = vadd.f32 0.0, %v1826
        %1828 = vmatprep.mubr.f32.mxu0 0.0
        %1829 = vmatmul.mubr.f32.gmra.mrb[0].mxu0 %v1579
        %v1830 = vpop.f32.mrb[0].mxu0
        %v1831 = vadd.f32 0.0, %v1830
        %v1832 = vpop.f32.mrb[0].mxu0
        %v1833 = vadd.f32 0.0, %v1832
        %1834 = vmatprep.mubr.f32.mxu0 0.0
        %1835 = vmatmul.mubr.f32.gmra.mrb[0].mxu0 %v1582
        %v1836 = vpop.f32.mrb[0].mxu0
        %v1837 = vadd.f32 0.0, %v1836
        %v1838 = vpop.f32.mrb[0].mxu0
        %v1839 = vadd.f32 0.0, %v1838
        %1840 = vdwg.mxu0
        %v1841 = vmax.f32 %v1651, %v1663
        %v1842 = vmax.f32 %v1657, %v1669
        %v1843 = vmax.f32 %v1841, %v1675
        %v1844 = vmax.f32 %v1842, %v1681
        %v1845 = vmax.f32 %v1843, %v1687
        %v1846 = vmax.f32 %v1844, %v1693
        %v1847 = vmax.f32 %v1845, %v1699
        %v1848 = vmax.f32 %v1846, %v1705
        %v1849 = vmax.f32 %v1847, %v1711
        %v1850 = vmax.f32 %v1848, %v1717
        %v1851 = vmax.f32 %v1849, %v1723
        %v1852 = vmax.f32 %v1850, %v1729
        %v1853 = vmax.f32 %v1851, %v1735
        %v1854 = vmax.f32 %v1852, %v1741
        %v1855 = vmax.f32 %v1853, %v1747
        %v1856 = vmax.f32 %v1854, %v1753
        %v1857 = vmax.f32 %v1855, %v1759
        %v1858 = vmax.f32 %v1856, %v1765
        %v1859 = vmax.f32 %v1857, %v1771
        %v1860 = vmax.f32 %v1858, %v1777
        %v1861 = vmax.f32 %v1859, %v1783
        %v1862 = vmax.f32 %v1860, %v1789
        %v1863 = vmax.f32 %v1861, %v1795
        %v1864 = vmax.f32 %v1862, %v1801
        %v1865 = vmax.f32 %v1863, %v1807
        %v1866 = vmax.f32 %v1864, %v1813
        %v1867 = vmax.f32 %v1865, %v1819
        %v1868 = vmax.f32 %v1866, %v1825
        %v1869 = vmax.f32 %v1867, %v1831
        %v1870 = vmax.f32 %v1868, %v1837
        %v1871 = vmax.f32 %v1869, %v1870
        %v1872 = vrot.slane %v1871, 4
        %v1873 = vmax.f32 %v1871, %v1872
        %v1874 = vrot.slane %v1873, 2
        %v1875 = vmax.f32 %v1873, %v1874
        %v1876 = vrot.slane %v1875, 1
        %v1877 = vmax.f32 %v1875, %v1876
        %v1878 = vmax.f32 %v1653, %v1665
        %v1879 = vmax.f32 %v1659, %v1671
        %v1880 = vmax.f32 %v1878, %v1677
        %v1881 = vmax.f32 %v1879, %v1683
        %v1882 = vmax.f32 %v1880, %v1689
        %v1883 = vmax.f32 %v1881, %v1695
        %v1884 = vmax.f32 %v1882, %v1701
        %v1885 = vmax.f32 %v1883, %v1707
        %v1886 = vmax.f32 %v1884, %v1713
        %v1887 = vmax.f32 %v1885, %v1719
        %v1888 = vmax.f32 %v1886, %v1725
        %v1889 = vmax.f32 %v1887, %v1731
        %v1890 = vmax.f32 %v1888, %v1737
        %v1891 = vmax.f32 %v1889, %v1743
        %v1892 = vmax.f32 %v1890, %v1749
        %v1893 = vmax.f32 %v1891, %v1755
        %v1894 = vmax.f32 %v1892, %v1761
        %v1895 = vmax.f32 %v1893, %v1767
        %v1896 = vmax.f32 %v1894, %v1773
        %v1897 = vmax.f32 %v1895, %v1779
        %v1898 = vmax.f32 %v1896, %v1785
        %v1899 = vmax.f32 %v1897, %v1791
        %v1900 = vmax.f32 %v1898, %v1797
        %v1901 = vmax.f32 %v1899, %v1803
        %v1902 = vmax.f32 %v1900, %v1809
        %v1903 = vmax.f32 %v1901, %v1815
        %v1904 = vmax.f32 %v1902, %v1821
        %v1905 = vmax.f32 %v1903, %v1827
        %v1906 = vmax.f32 %v1904, %v1833
        %v1907 = vmax.f32 %v1905, %v1839
        %v1908 = vmax.f32 %v1906, %v1907
        %v1909 = vrot.slane %v1908, 4
        %v1910 = vmax.f32 %v1908, %v1909
        %v1911 = vrot.slane %v1910, 2
        %v1912 = vmax.f32 %v1910, %v1911
        %v1913 = vrot.slane %v1912, 1
        %v1914 = vmax.f32 %v1912, %v1913
        %v1915 = vsub.f32 %v1651, %v1877
        %v1916 = vsub.f32 %v1653, %v1914
        %v1917 = vsub.f32 %v1657, %v1877
        %v1918 = vsub.f32 %v1659, %v1914
        %v1919 = vsub.f32 %v1663, %v1877
        %v1920 = vsub.f32 %v1665, %v1914
        %v1921 = vsub.f32 %v1669, %v1877
        %v1922 = vsub.f32 %v1671, %v1914
        %v1923 = vsub.f32 %v1675, %v1877
        %v1924 = vsub.f32 %v1677, %v1914
        %v1925 = vsub.f32 %v1681, %v1877
        %v1926 = vsub.f32 %v1683, %v1914
        %v1927 = vsub.f32 %v1687, %v1877
        %v1928 = vsub.f32 %v1689, %v1914
        %v1929 = vsub.f32 %v1693, %v1877
        %v1930 = vsub.f32 %v1695, %v1914
        %v1931 = vsub.f32 %v1699, %v1877
        %v1932 = vsub.f32 %v1701, %v1914
        %v1933 = vsub.f32 %v1705, %v1877
        %v1934 = vsub.f32 %v1707, %v1914
        %v1935 = vsub.f32 %v1711, %v1877
        %v1936 = vsub.f32 %v1713, %v1914
        %v1937 = vsub.f32 %v1717, %v1877
        %v1938 = vsub.f32 %v1719, %v1914
        %v1939 = vsub.f32 %v1723, %v1877
        %v1940 = vsub.f32 %v1725, %v1914
        %v1941 = vsub.f32 %v1729, %v1877
        %v1942 = vsub.f32 %v1731, %v1914
        %v1943 = vsub.f32 %v1735, %v1877
        %v1944 = vsub.f32 %v1737, %v1914
        %v1945 = vsub.f32 %v1741, %v1877
        %v1946 = vsub.f32 %v1743, %v1914
        %v1947 = vsub.f32 %v1747, %v1877
        %v1948 = vsub.f32 %v1749, %v1914
        %v1949 = vsub.f32 %v1753, %v1877
        %v1950 = vsub.f32 %v1755, %v1914
        %v1951 = vsub.f32 %v1759, %v1877
        %v1952 = vsub.f32 %v1761, %v1914
        %v1953 = vsub.f32 %v1765, %v1877
        %v1954 = vsub.f32 %v1767, %v1914
        %v1955 = vsub.f32 %v1771, %v1877
        %v1956 = vsub.f32 %v1773, %v1914
        %v1957 = vsub.f32 %v1777, %v1877
        %v1958 = vsub.f32 %v1779, %v1914
        %v1959 = vsub.f32 %v1783, %v1877
        %v1960 = vsub.f32 %v1785, %v1914
        %v1961 = vsub.f32 %v1789, %v1877
        %v1962 = vsub.f32 %v1791, %v1914
        %v1963 = vsub.f32 %v1795, %v1877
        %v1964 = vsub.f32 %v1797, %v1914
        %v1965 = vsub.f32 %v1801, %v1877
        %v1966 = vsub.f32 %v1803, %v1914
        %v1967 = vsub.f32 %v1807, %v1877
        %v1968 = vsub.f32 %v1809, %v1914
        %v1969 = vsub.f32 %v1813, %v1877
        %v1970 = vsub.f32 %v1815, %v1914
        %v1971 = vsub.f32 %v1819, %v1877
        %v1972 = vsub.f32 %v1821, %v1914
        %v1973 = vsub.f32 %v1825, %v1877
        %v1974 = vsub.f32 %v1827, %v1914
        %v1975 = vsub.f32 %v1831, %v1877
        %v1976 = vsub.f32 %v1833, %v1914
        %v1977 = vsub.f32 %v1837, %v1877
        %v1978 = vsub.f32 %v1839, %v1914
        %v1979 = vmul.f32 %v1915, 1.442695
        %v1980 = vpow.pop %v1979
        %v1981 = vmul.f32 %v1916, 1.442695
        %v1982 = vpow.pop %v1981
        %v1983 = vmul.f32 %v1917, 1.442695
        %v1984 = vpow.pop %v1983
        %v1985 = vmul.f32 %v1918, 1.442695
        %v1986 = vpow.pop %v1985
        %v1987 = vmul.f32 %v1919, 1.442695
        %v1988 = vpow.pop %v1987
        %v1989 = vmul.f32 %v1920, 1.442695
        %v1990 = vpow.pop %v1989
        %v1991 = vmul.f32 %v1921, 1.442695
        %v1992 = vpow.pop %v1991
        %v1993 = vmul.f32 %v1922, 1.442695
        %v1994 = vpow.pop %v1993
        %v1995 = vmul.f32 %v1923, 1.442695
        %v1996 = vpow.pop %v1995
        %v1997 = vmul.f32 %v1924, 1.442695
        %v1998 = vpow.pop %v1997
        %v1999 = vmul.f32 %v1925, 1.442695
        %v2000 = vpow.pop %v1999
        %v2001 = vmul.f32 %v1926, 1.442695
        %v2002 = vpow.pop %v2001
        %v2003 = vmul.f32 %v1927, 1.442695
        %v2004 = vpow.pop %v2003
        %v2005 = vmul.f32 %v1928, 1.442695
        %v2006 = vpow.pop %v2005
        %v2007 = vmul.f32 %v1929, 1.442695
        %v2008 = vpow.pop %v2007
        %v2009 = vmul.f32 %v1930, 1.442695
        %v2010 = vpow.pop %v2009
        %v2011 = vmul.f32 %v1931, 1.442695
        %v2012 = vpow.pop %v2011
        %v2013 = vmul.f32 %v1932, 1.442695
        %v2014 = vpow.pop %v2013
        %v2015 = vmul.f32 %v1933, 1.442695
        %v2016 = vpow.pop %v2015
        %v2017 = vmul.f32 %v1934, 1.442695
        %v2018 = vpow.pop %v2017
        %v2019 = vmul.f32 %v1935, 1.442695
        %v2020 = vpow.pop %v2019
        %v2021 = vmul.f32 %v1936, 1.442695
        %v2022 = vpow.pop %v2021
        %v2023 = vmul.f32 %v1937, 1.442695
        %v2024 = vpow.pop %v2023
        %v2025 = vmul.f32 %v1938, 1.442695
        %v2026 = vpow.pop %v2025
        %v2027 = vmul.f32 %v1939, 1.442695
        %v2028 = vpow.pop %v2027
        %v2029 = vmul.f32 %v1940, 1.442695
        %v2030 = vpow.pop %v2029
        %v2031 = vmul.f32 %v1941, 1.442695
        %v2032 = vpow.pop %v2031
        %v2033 = vmul.f32 %v1942, 1.442695
        %v2034 = vpow.pop %v2033
        %v2035 = vmul.f32 %v1943, 1.442695
        %v2036 = vpow.pop %v2035
        %v2037 = vmul.f32 %v1944, 1.442695
        %v2038 = vpow.pop %v2037
        %v2039 = vmul.f32 %v1945, 1.442695
        %v2040 = vpow.pop %v2039
        %v2041 = vmul.f32 %v1946, 1.442695
        %v2042 = vpow.pop %v2041
        %v2043 = vmul.f32 %v1947, 1.442695
        %v2044 = vpow.pop %v2043
        %v2045 = vmul.f32 %v1948, 1.442695
        %v2046 = vpow.pop %v2045
        %v2047 = vmul.f32 %v1949, 1.442695
        %v2048 = vpow.pop %v2047
        %v2049 = vmul.f32 %v1950, 1.442695
        %v2050 = vpow.pop %v2049
        %v2051 = vmul.f32 %v1951, 1.442695
        %v2052 = vpow.pop %v2051
        %v2053 = vmul.f32 %v1952, 1.442695
        %v2054 = vpow.pop %v2053
        %v2055 = vmul.f32 %v1953, 1.442695
        %v2056 = vpow.pop %v2055
        %v2057 = vmul.f32 %v1954, 1.442695
        %v2058 = vpow.pop %v2057
        %v2059 = vmul.f32 %v1955, 1.442695
        %v2060 = vpow.pop %v2059
        %v2061 = vmul.f32 %v1956, 1.442695
        %v2062 = vpow.pop %v2061
        %v2063 = vmul.f32 %v1957, 1.442695
        %v2064 = vpow.pop %v2063
        %v2065 = vmul.f32 %v1958, 1.442695
        %v2066 = vpow.pop %v2065
        %v2067 = vmul.f32 %v1959, 1.442695
        %v2068 = vpow.pop %v2067
        %v2069 = vmul.f32 %v1960, 1.442695
        %v2070 = vpow.pop %v2069
        %v2071 = vmul.f32 %v1961, 1.442695
        %v2072 = vpow.pop %v2071
        %v2073 = vmul.f32 %v1962, 1.442695
        %v2074 = vpow.pop %v2073
        %v2075 = vmul.f32 %v1963, 1.442695
        %v2076 = vpow.pop %v2075
        %v2077 = vmul.f32 %v1964, 1.442695
        %v2078 = vpow.pop %v2077
        %v2079 = vmul.f32 %v1965, 1.442695
        %v2080 = vpow.pop %v2079
        %v2081 = vmul.f32 %v1966, 1.442695
        %v2082 = vpow.pop %v2081
        %v2083 = vmul.f32 %v1967, 1.442695
        %v2084 = vpow.pop %v2083
        %v2085 = vmul.f32 %v1968, 1.442695
        %v2086 = vpow.pop %v2085
        %v2087 = vmul.f32 %v1969, 1.442695
        %v2088 = vpow.pop %v2087
        %v2089 = vmul.f32 %v1970, 1.442695
        %v2090 = vpow.pop %v2089
        %v2091 = vmul.f32 %v1971, 1.442695
        %v2092 = vpow.pop %v2091
        %v2093 = vmul.f32 %v1972, 1.442695
        %v2094 = vpow.pop %v2093
        %v2095 = vmul.f32 %v1973, 1.442695
        %v2096 = vpow.pop %v2095
        %v2097 = vmul.f32 %v1974, 1.442695
        %v2098 = vpow.pop %v2097
        %v2099 = vmul.f32 %v1975, 1.442695
        %v2100 = vpow.pop %v2099
        %v2101 = vmul.f32 %v1976, 1.442695
        %v2102 = vpow.pop %v2101
        %v2103 = vmul.f32 %v1977, 1.442695
        %v2104 = vpow.pop %v2103
        %v2105 = vmul.f32 %v1978, 1.442695
        %v2106 = vpow.pop %v2105
        %v2107 = vadd.f32 %v1980, %v1984
        %v2108 = vadd.f32 %v2107, %v1988
        %v2109 = vadd.f32 %v2108, %v1992
        %v2110 = vadd.f32 %v2109, %v1996
        %v2111 = vadd.f32 %v2110, %v2000
        %v2112 = vadd.f32 %v2111, %v2004
        %v2113 = vadd.f32 %v2112, %v2008
        %v2114 = vadd.f32 %v2113, %v2012
        %v2115 = vadd.f32 %v2114, %v2016
        %v2116 = vadd.f32 %v2115, %v2020
        %v2117 = vadd.f32 %v2116, %v2024
        %v2118 = vadd.f32 %v2117, %v2028
        %v2119 = vadd.f32 %v2118, %v2032
        %v2120 = vadd.f32 %v2119, %v2036
        %v2121 = vadd.f32 %v2120, %v2040
        %v2122 = vadd.f32 %v2121, %v2044
        %v2123 = vadd.f32 %v2122, %v2048
        %v2124 = vadd.f32 %v2123, %v2052
        %v2125 = vadd.f32 %v2124, %v2056
        %v2126 = vadd.f32 %v2125, %v2060
        %v2127 = vadd.f32 %v2126, %v2064
        %v2128 = vadd.f32 %v2127, %v2068
        %v2129 = vadd.f32 %v2128, %v2072
        %v2130 = vadd.f32 %v2129, %v2076
        %v2131 = vadd.f32 %v2130, %v2080
        %v2132 = vadd.f32 %v2131, %v2084
        %v2133 = vadd.f32 %v2132, %v2088
        %v2134 = vadd.f32 %v2133, %v2092
        %v2135 = vadd.f32 %v2134, %v2096
        %v2136 = vadd.f32 %v2135, %v2100
        %v2137 = vadd.f32 %v2136, %v2104
        %v2138 = vrot.slane %v2137, 4
        %v2139 = vadd.f32 %v2137, %v2138
        %v2140 = vrot.slane %v2139, 2
        %v2141 = vadd.f32 %v2139, %v2140
        %v2142 = vrot.slane %v2141, 1
        %v2143 = vadd.f32 %v2141, %v2142
        %v2144 = vadd.f32 %v1982, %v1986
        %v2145 = vadd.f32 %v2144, %v1990
        %v2146 = vadd.f32 %v2145, %v1994
        %v2147 = vadd.f32 %v2146, %v1998
        %v2148 = vadd.f32 %v2147, %v2002
        %v2149 = vadd.f32 %v2148, %v2006
        %v2150 = vadd.f32 %v2149, %v2010
        %v2151 = vadd.f32 %v2150, %v2014
        %v2152 = vadd.f32 %v2151, %v2018
        %v2153 = vadd.f32 %v2152, %v2022
        %v2154 = vadd.f32 %v2153, %v2026
        %v2155 = vadd.f32 %v2154, %v2030
        %v2156 = vadd.f32 %v2155, %v2034
        %v2157 = vadd.f32 %v2156, %v2038
        %v2158 = vadd.f32 %v2157, %v2042
        %v2159 = vadd.f32 %v2158, %v2046
        %v2160 = vadd.f32 %v2159, %v2050
        %v2161 = vadd.f32 %v2160, %v2054
        %v2162 = vadd.f32 %v2161, %v2058
        %v2163 = vadd.f32 %v2162, %v2062
        %v2164 = vadd.f32 %v2163, %v2066
        %v2165 = vadd.f32 %v2164, %v2070
        %v2166 = vadd.f32 %v2165, %v2074
        %v2167 = vadd.f32 %v2166, %v2078
        %v2168 = vadd.f32 %v2167, %v2082
        %v2169 = vadd.f32 %v2168, %v2086
        %v2170 = vadd.f32 %v2169, %v2090
        %v2171 = vadd.f32 %v2170, %v2094
        %v2172 = vadd.f32 %v2171, %v2098
        %v2173 = vadd.f32 %v2172, %v2102
        %v2174 = vadd.f32 %v2173, %v2106
        %v2175 = vrot.slane %v2174, 4
        %v2176 = vadd.f32 %v2174, %v2175
        %v2177 = vrot.slane %v2176, 2
        %v2178 = vadd.f32 %v2176, %v2177
        %v2179 = vrot.slane %v2178, 1
        %v2180 = vadd.f32 %v2178, %v2179
        %2181 = vmatprep.subr.mxu0 %v1982
        %2182 = vmatpush1.msra.mxu0 %v1980
        %2183 = vmatprep.subr.mxu0 %v1986
        %2184 = vmatpush1.msra.mxu0 %v1984
        %2185 = vmatprep.subr.mxu0 %v1990
        %2186 = vmatpush1.msra.mxu0 %v1988
        %2187 = vmatprep.subr.mxu0 %v1994
        %2188 = vmatpush1.msra.mxu0 %v1992
        %2189 = vmatprep.subr.mxu0 %v1998
        %2190 = vmatpush1.msra.mxu0 %v1996
        %2191 = vmatprep.subr.mxu0 %v2002
        %2192 = vmatpush1.msra.mxu0 %v2000
        %2193 = vmatprep.subr.mxu0 %v2006
        %2194 = vmatpush1.msra.mxu0 %v2004
        %2195 = vmatprep.subr.mxu0 %v2010
        %2196 = vmatpush1.msra.mxu0 %v2008
        %2197 = vmatprep.subr.mxu0 %v2014
        %2198 = vmatpush1.msra.mxu0 %v2012
        %2199 = vmatprep.subr.mxu0 %v2018
        %2200 = vmatpush1.msra.mxu0 %v2016
        %2201 = vmatprep.subr.mxu0 %v2022
        %2202 = vmatpush1.msra.mxu0 %v2020
        %2203 = vmatprep.subr.mxu0 %v2026
        %2204 = vmatpush1.msra.mxu0 %v2024
        %2205 = vmatprep.subr.mxu0 %v2030
        %2206 = vmatpush1.msra.mxu0 %v2028
        %2207 = vmatprep.subr.mxu0 %v2034
        %2208 = vmatpush1.msra.mxu0 %v2032
        %2209 = vmatprep.subr.mxu0 %v2038
        %2210 = vmatpush1.msra.mxu0 %v2036
        %2211 = vmatprep.subr.mxu0 %v2042
        %2212 = vmatpush1.msra.mxu0 %v2040
        %2213 = vmatprep.subr.mxu0 %v2046
        %2214 = vmatpush1.msra.mxu0 %v2044
        %2215 = vmatprep.subr.mxu0 %v2050
        %2216 = vmatpush1.msra.mxu0 %v2048
        %2217 = vmatprep.subr.mxu0 %v2054
        %2218 = vmatpush1.msra.mxu0 %v2052
        %2219 = vmatprep.subr.mxu0 %v2058
        %2220 = vmatpush1.msra.mxu0 %v2056
        %2221 = vmatprep.subr.mxu0 %v2062
        %2222 = vmatpush1.msra.mxu0 %v2060
        %2223 = vmatprep.subr.mxu0 %v2066
        %2224 = vmatpush1.msra.mxu0 %v2064
        %2225 = vmatprep.subr.mxu0 %v2070
        %2226 = vmatpush1.msra.mxu0 %v2068
        %2227 = vmatprep.subr.mxu0 %v2074
        %2228 = vmatpush1.msra.mxu0 %v2072
        %2229 = vmatprep.subr.mxu0 %v2078
        %2230 = vmatpush1.msra.mxu0 %v2076
        %2231 = vmatprep.subr.mxu0 %v2082
        %2232 = vmatpush1.msra.mxu0 %v2080
        %2233 = vmatprep.subr.mxu0 %v2086
        %2234 = vmatpush1.msra.mxu0 %v2084
        %2235 = vmatprep.subr.mxu0 %v2090
        %2236 = vmatpush1.msra.mxu0 %v2088
        %2237 = vmatprep.subr.mxu0 %v2094
        %2238 = vmatpush1.msra.mxu0 %v2092
        %2239 = vmatprep.subr.mxu0 %v2098
        %2240 = vmatpush1.msra.mxu0 %v2096
        %2241 = vmatprep.subr.mxu0 %v2102
        %2242 = vmatpush1.msra.mxu0 %v2100
        %2243 = vmatprep.subr.mxu0 %v2106
        %2244 = vmatpush1.msra.mxu0 %v2104
        %2245 = vmatprep.mubr.f32.mxu0 %v1423
        %2246 = vmatmul.mubr.f32.gmra.mrb[0].mxu0 %v1422
        %v2247 = vpop.f32.mrb[0].mxu0
        %v2248 = vadd.f32 0.0, %v2247
        %v2249 = vpop.f32.mrb[0].mxu0
        %v2250 = vadd.f32 0.0, %v2249
        %2251 = vdwg.mxu0
        %v2252 = vrcp.pop %v2143
        %v2253 = vmul.f32 1.0, %v2252
        %v2254 = vrcp.pop %v2180
        %v2255 = vmul.f32 1.0, %v2254
        %v2256 = vmul.f32 %v2248, %v2253
        %v2257 = vmul.f32 %v2250, %v2255
        %s2258 = smul.addr %s1410, 8
        %s2259 = scalar_lea.vmem [#allocation4], %s2258
        %2260 = vst [vmem:[%s2259] sm:$0xff] %v2256
        %2261 = vst [vmem:[%s2259 + $0x8] sm:$0xff] %v2257
        %v2262 = vld [vmem:[%s5] sm:$0xff]
        %v2263 = vld [vmem:[%s5 + $0x8] sm:$0xff]
        %v2264 = vld [vmem:[#allocation4] sm:$0xff]
        %v2265 = vld [vmem:[#allocation4 + $0x8] sm:$0xff]
        %v2266 = vld [vmem:[#allocation4 + $0x10] sm:$0xff]
        %v2267 = vld [vmem:[#allocation4 + $0x18] sm:$0xff]
        %v2268 = vld [vmem:[%s6] sm:$0xf]
        %2270 = vset.pattern.permute.xlu0 0
        %2271 = vperm.xlu0 %2270, %v2268
        %v2272 = vpop.permute.xlu0 %2271
        %2274 = vxpose.xlu0.b32.start [1/16] %v2262, 128
        %2275 = vxpose.xlu0.b32.cont [2/16] %v2263, 128
        %2276 = vxpose.xlu0.b32.cont [3/16] 0.0, 128
        %2277 = vxpose.xlu0.b32.cont [4/16] 0.0, 128
        %2278 = vxpose.xlu0.b32.cont [5/16] 0.0, 128
        %2279 = vxpose.xlu0.b32.cont [6/16] 0.0, 128
        %2280 = vxpose.xlu0.b32.cont [7/16] 0.0, 128
        %2281 = vxpose.xlu0.b32.cont [8/16] 0.0, 128
        %2282 = vxpose.xlu0.b32.cont [9/16] 0.0, 128
        %2283 = vxpose.xlu0.b32.cont [10/16] 0.0, 128
        %2284 = vxpose.xlu0.b32.cont [11/16] 0.0, 128
        %2285 = vxpose.xlu0.b32.cont [12/16] 0.0, 128
        %2286 = vxpose.xlu0.b32.cont [13/16] 0.0, 128
        %2287 = vxpose.xlu0.b32.cont [14/16] 0.0, 128
        %2288 = vxpose.xlu0.b32.cont [15/16] 0.0, 128
        %2289 = vxpose.xlu0.b32.end [16/16] 0.0, 128
        %v2290 = vpop.trf.xlu0
        %v2291 = vpop.trf.xlu0
        %v2292 = vpop.trf.xlu0
        %v2293 = vpop.trf.xlu0
        %v2294 = vpop.trf.xlu0
        %v2295 = vpop.trf.xlu0
        %v2296 = vpop.trf.xlu0
        %v2297 = vpop.trf.xlu0
        %v2298 = vpop.trf.xlu0
        %v2299 = vpop.trf.xlu0
        %v2300 = vpop.trf.xlu0
        %v2301 = vpop.trf.xlu0
        %v2302 = vpop.trf.xlu0
        %v2303 = vpop.trf.xlu0
        %v2304 = vpop.trf.xlu0
        %v2305 = vpop.trf.xlu0
        %vm2306 = vcmask 130048
        %v2308 = vsel %vm2306, %v2290, 0
        %2310 = vmatprep.subr.mxu0 %v2265
        %2311 = vmatpush1.msra.mxu0 %v2264
        %2312 = vmatprep.subr.mxu0 %v2267
        %2313 = vmatpush1.msra.mxu0 %v2266
        %2314 = vmatprep.subr.mxu0 0.0
        %2315 = vmatpush1.msra.mxu0 0.0
        %2316 = vmatprep.subr.mxu0 0.0
        %2317 = vmatpush1.msra.mxu0 0.0
        %2318 = vmatprep.subr.mxu0 0.0
        %2319 = vmatpush1.msra.mxu0 0.0
        %2320 = vmatprep.subr.mxu0 0.0
        %2321 = vmatpush1.msra.mxu0 0.0
        %2322 = vmatprep.subr.mxu0 0.0
        %2323 = vmatpush1.msra.mxu0 0.0
        %2324 = vmatprep.subr.mxu0 0.0
        %2325 = vmatpush1.msra.mxu0 0.0
        %2326 = vmatprep.subr.mxu0 0.0
        %2327 = vmatpush1.msra.mxu0 0.0
        %2328 = vmatprep.subr.mxu0 0.0
        %2329 = vmatpush1.msra.mxu0 0.0
        %2330 = vmatprep.subr.mxu0 0.0
        %2331 = vmatpush1.msra.mxu0 0.0
        %2332 = vmatprep.subr.mxu0 0.0
        %2333 = vmatpush1.msra.mxu0 0.0
        %2334 = vmatprep.subr.mxu0 0.0
        %2335 = vmatpush1.msra.mxu0 0.0
        %2336 = vmatprep.subr.mxu0 0.0
        %2337 = vmatpush1.msra.mxu0 0.0
        %2338 = vmatprep.subr.mxu0 0.0
        %2339 = vmatpush1.msra.mxu0 0.0
        %2340 = vmatprep.subr.mxu0 0.0
        %2341 = vmatpush1.msra.mxu0 0.0
        %2342 = vmatprep.subr.mxu0 0.0
        %2343 = vmatpush1.msra.mxu0 0.0
        %2344 = vmatprep.subr.mxu0 0.0
        %2345 = vmatpush1.msra.mxu0 0.0
        %2346 = vmatprep.subr.mxu0 0.0
        %2347 = vmatpush1.msra.mxu0 0.0
        %2348 = vmatprep.subr.mxu0 0.0
        %2349 = vmatpush1.msra.mxu0 0.0
        %2350 = vmatprep.subr.mxu0 0.0
        %2351 = vmatpush1.msra.mxu0 0.0
        %2352 = vmatprep.subr.mxu0 0.0
        %2353 = vmatpush1.msra.mxu0 0.0
        %2354 = vmatprep.subr.mxu0 0.0
        %2355 = vmatpush1.msra.mxu0 0.0
        %2356 = vmatprep.subr.mxu0 0.0
        %2357 = vmatpush1.msra.mxu0 0.0
        %2358 = vmatprep.subr.mxu0 0.0
        %2359 = vmatpush1.msra.mxu0 0.0
        %2360 = vmatprep.subr.mxu0 0.0
        %2361 = vmatpush1.msra.mxu0 0.0
        %2362 = vmatprep.subr.mxu0 0.0
        %2363 = vmatpush1.msra.mxu0 0.0
        %2364 = vmatprep.subr.mxu0 0.0
        %2365 = vmatpush1.msra.mxu0 0.0
        %2366 = vmatprep.subr.mxu0 0.0
        %2367 = vmatpush1.msra.mxu0 0.0
        %2368 = vmatprep.subr.mxu0 0.0
        %2369 = vmatpush1.msra.mxu0 0.0
        %2370 = vmatprep.subr.mxu0 0.0
        %2371 = vmatpush1.msra.mxu0 0.0
        %2372 = vmatprep.subr.mxu0 0.0
        %2373 = vmatpush1.msra.mxu0 0.0
        %2374 = vmatprep.mubr.f32.mxu0 0.0
        %2375 = vmatmul.mubr.f32.gmra.mrb[0].mxu0 %v2308
        %v2376 = vpop.f32.mrb[0].mxu0
        %v2377 = vadd.f32 %v2272, %v2376
        %v2378 = vpop.f32.mrb[0].mxu0
        %v2379 = vadd.f32 %v2272, %v2378
        %2380 = vdwg.mxu0
        %v2382 = vadd.f32 %v2377, %v447
        %v2383 = vadd.f32 %v2379, %v463
        %v2386 = vcombine.low %v2382, %v2383
        %2388 = vst [vmem:[%s285] sm:$0xff] %v2386
        %s2389 = sand.u32 %s195, 1
        %s2390 = scalar_lea.sflag [#allocation6], %s2389
        %s2391 = sand.u32 %s195, 1
        %s2392 = smul.addr %s2391, 8
        %s2393 = scalar_lea.vmem [#allocation5], %s2392
        // Predicated region
        $region53: #{tpu_custom_call.1} parent=47 // pred_check
          %p2394 = pneg %p205
        $region54: #{tpu_custom_call.1} parent=47 // pred_check_branch
          %2396 = sbr.rel (%p2394) target = $region56
        $region55: #{tpu_custom_call.1} parent=47 // pred_region
          %s2397 = smul.u32 2, %s26
          %s2399 = ssub.s32 128, 128
          %2400 = vsyncadd %s2390, %s2399
          %s2401 = smul.addr %s25, 2
          %s2402 = sadd.s32 %s2397, %s2401
          %s2403 = smul.addr %s2402, 64
          %s2404 = scalar_lea.hbm %s7, %s2403
          %s2406 = sshll.u32 %s2393, 4
          %s2407 = int_to_ptr.vmem [resolvable:$true] %s2406
          %2409 = dma.vmem_to_hbm [thread:$0]  %s2407, 128, %s2404, %s2390
        $region56: #{tpu_custom_call.1} parent=47 // pred_fallthru
          _
      $region48: #{tpu_custom_call.1} parent=5 // pred_fallthru
        _
      %p2410 = scmp.le.s32.totalorder 2, %s16
      // Predicated region
      $region57: #{tpu_custom_call.1} parent=5 // pred_check
        %p2411 = pneg %p2410
      $region58: #{tpu_custom_call.1} parent=5 // pred_check_branch
        %2413 = sbr.rel (%p2411) target = $region60
      $region59: #{tpu_custom_call.1} parent=5 // pred_region
        %s2414 = ssub.s32 %s16, 2
        // Predicated region
        $region61: #{tpu_custom_call.1} parent=59 // pred_check
          %p2415 = pneg %p211
        $region62: #{tpu_custom_call.1} parent=59 // pred_check_branch
          %2417 = sbr.rel (%p2415) target = $region64
        $region63: #{tpu_custom_call.1} parent=59 // pred_region
          %s2418 = sand.u32 %s196, 1
          %s2419 = scalar_lea.sflag [#allocation6], %s2418
          %s2420 = sand.u32 %s196, 1
          %s2421 = smul.addr %s2420, 8
          %s2422 = scalar_lea.vmem [#allocation5], %s2421
          %2423 = dma.done %s2419, 128
        $region64: #{tpu_custom_call.1} parent=59 // pred_fallthru
          _
      $region60: #{tpu_custom_call.1} parent=5 // pred_fallthru
        _
    $region6: #{tpu_custom_call.1} parent=1 // loop_footer
      %s20 = sadd.s32 1, %s16
    $region7: #{tpu_custom_call.1} parent=1 // loop_footer_branch
      %15 = sbr.rel target = $region3
    $region8: #{tpu_custom_call.1} parent=1 // loop_exit
      _
    %2424 = vsyncpa [#allocation6], 1
    %s2425 = scalar_lea.sflag [#allocation6], 1
    %2426 = vsyncpa %s2425, 1

</llo_original>
